<compile_context>
chip_gen: v7x
topology: tpu7x:2x2x1
jax: 0.10.0
libtpu: 0.0.40
codegen_flags: <defaults>
</compile_context>

<pallas_src>
import jax
import jax.numpy as jnp
from jax.experimental import pallas as pl
from jax.experimental.pallas import tpu as pltpu

HIDDEN_DIM = 64          # logical hidden size (matches the PyTorch module)
PAD_DIM = 128            # lane-padded hidden size used inside the kernel
LAYER_DIM = 3
OUTPUT_DIM = 1


def rnn_kernel(x_ref, wih0_ref, w01_ref, w12_ref, w2_ref, bias_ref,
               wfc_ref, bfc_ref, out_ref, pre0_ref):
    """Whole-sequence, whole-batch wavefront RNN forward in VMEM.

    x_ref    : (T*B, D)    raw input, time-major, flattened over (T, B), bf16
    wih0_ref : (D, HP)     layer-0 input->hidden weights (in, out), bf16
    w01_ref  : (HP, 2*HP)  [whh0 | wih1] fused RHS, bf16
    w12_ref  : (HP, 2*HP)  [whh1 | wih2] fused RHS, bf16
    w2_ref   : (HP, HP)    whh2, bf16
    bias_ref : (L, 1, HP)  combined b_ih + b_hh per layer, f32 (padded lanes 0)
    wfc_ref  : (1, HP)     fc weight row (output_dim == 1), f32, zero-padded
    bfc_ref  : (1, 1)      fc bias, f32
    out_ref  : (B, 1)      fc output for the last timestep
    pre0_ref : (T*B, HP)   scratch: hoisted layer-0 pre-activations, f32
    """
    TB = x_ref.shape[0]
    B = out_ref.shape[0]
    T = TB // B
    HP = pre0_ref.shape[-1]
    L = LAYER_DIM
    bf16 = jnp.bfloat16

    # Hoisted layer-0 input projection for all T timesteps (one batched MXU
    # op, K = D) + fused bias.  Re-sliced per wavefront step from VMEM.
    pre0_ref[...] = (
        jnp.dot(x_ref[...], wih0_ref[...], preferred_element_type=jnp.float32)
        + bias_ref[0])

    b1 = bias_ref[1]                      # (1, HP), hoisted out of the loop
    b2 = bias_ref[2]

    zero = jnp.zeros((B, HP), jnp.float32)
    h0, h1, h2 = zero, zero, zero         # carried states (f32), padded lanes 0

    # Wavefront: step s computes h0[s], h1[s-1], h2[s-2].  All matmuls inside
    # a step only read states produced by the previous step, so they are
    # independent and overlap on the MXU.
    for s in range(T + L - 1):            # static unroll: T + L - 1 = 10 rounds
        need0 = s < T                     # h0[s]
        need1 = 0 <= s - 1 < T            # h1[s-1]
        need2 = 0 <= s - 2 < T            # h2[s-2]

        # Fused products from the *carried* states (skip provably-zero ones).
        fA = fB = fC = None
        if (need0 or need1) and s >= 1:   # h0 carried is nonzero only for s>=1
            fA = jnp.dot(h0.astype(bf16), w01_ref[...],
                         preferred_element_type=jnp.float32)   # (B, 2HP)
        if (need1 or need2) and s >= 2:
            fB = jnp.dot(h1.astype(bf16), w12_ref[...],
                         preferred_element_type=jnp.float32)   # (B, 2HP)
        if need2 and s >= 3:
            fC = jnp.dot(h2.astype(bf16), w2_ref[...],
                         preferred_element_type=jnp.float32)   # (B, HP)

        if need0:
            acc0 = pre0_ref[s * B:(s + 1) * B, :]
            if fA is not None:
                acc0 = acc0 + fA[:, :HP]          # h0[s-1] @ whh0
            h0 = jnp.tanh(acc0)
        if need1:
            acc1 = b1 + fA[:, HP:]                # h0[s-1] @ wih1
            if fB is not None:
                acc1 = acc1 + fB[:, :HP]          # h1[s-2] @ whh1
            h1 = jnp.tanh(acc1)
        if need2:
            acc2 = b2 + fB[:, HP:]                # h1[s-2] @ wih2
            if fC is not None:
                acc2 = acc2 + fC                  # h2[s-3] @ whh2
            h2 = jnp.tanh(acc2)

    # Final Linear head on the last timestep: output_dim == 1, so use a VPU
    # multiply + lane reduction instead of an MXU matmul with N=1.
    out_ref[...] = (jnp.sum(h2 * wfc_ref[...], axis=-1, keepdims=True)
                    + bfc_ref[...])


@jax.jit
def rnn_model_forward(x, params):
    """x: (B, T, D) float32.  Returns (B, 1, OUTPUT_DIM) like the PyTorch module."""
    wih0, w01, w12, w2, bias, wfc, bfc = params
    B, T, D = x.shape

    # Time-major, flattened over (T, B); no padded copy is materialized.
    xt = jnp.transpose(x, (1, 0, 2)).reshape(T * B, D).astype(jnp.bfloat16)

    vmem = pl.BlockSpec(memory_space=pltpu.MemorySpace.VMEM)
    out = pl.pallas_call(
        rnn_kernel,
        out_shape=jax.ShapeDtypeStruct((B, OUTPUT_DIM), jnp.float32),
        in_specs=[vmem] * 8,
        out_specs=vmem,
        scratch_shapes=[
            pltpu.VMEM((T * B, PAD_DIM), jnp.float32),   # hoisted layer-0 preacts
        ],
    )(xt, wih0, w01, w12, w2, bias, wfc, bfc)

    return out.reshape(B, 1, OUTPUT_DIM)


def init_params(key, input_dim):
    """Deterministic PyTorch-style init (uniform +-1/sqrt(H))."""
    H, HP, L, O = HIDDEN_DIM, PAD_DIM, LAYER_DIM, OUTPUT_DIM
    stdv = 1.0 / (H ** 0.5)
    keys = jax.random.split(key, 4 * L + 2)
    ki = iter(keys)

    torch_rnn = []
    wih_pad = []                                   # layers 1..L-1, (HP, HP) (in, out)
    whh_pad = []                                   # all layers,   (HP, HP) (in, out)
    bias_stack = jnp.zeros((L, 1, HP), jnp.float32)   # padded lanes stay exactly 0
    wih0_pad = jnp.zeros((input_dim, HP), jnp.float32)
    for l in range(L):
        in_dim = input_dim if l == 0 else H
        w_ih = jax.random.uniform(next(ki), (H, in_dim), jnp.float32, -stdv, stdv)
        w_hh = jax.random.uniform(next(ki), (H, H), jnp.float32, -stdv, stdv)
        b_ih = jax.random.uniform(next(ki), (H,), jnp.float32, -stdv, stdv)
        b_hh = jax.random.uniform(next(ki), (H,), jnp.float32, -stdv, stdv)
        torch_rnn.append((w_ih, w_hh, b_ih, b_hh))
        if l == 0:
            wih0_pad = wih0_pad.at[:, :H].set(w_ih.T)               # (D, HP)
        else:
            wih_pad.append(
                jnp.zeros((HP, HP), jnp.float32).at[:H, :H].set(w_ih.T))
        whh_pad.append(jnp.zeros((HP, HP), jnp.float32).at[:H, :H].set(w_hh.T))
        bias_stack = bias_stack.at[l, 0, :H].set(b_ih + b_hh)

    # Fused wavefront RHS blocks: lanes [0:HP) = own recurrence (whh_l),
    # lanes [HP:2HP) = next layer's input projection (wih_{l+1}).  bf16 MXU.
    w01 = jnp.concatenate([whh_pad[0], wih_pad[0]], axis=1).astype(jnp.bfloat16)
    w12 = jnp.concatenate([whh_pad[1], wih_pad[1]], axis=1).astype(jnp.bfloat16)
    w2 = whh_pad[2].astype(jnp.bfloat16)
    wih0_bf = wih0_pad.astype(jnp.bfloat16)

    fc_stdv = 1.0 / (H ** 0.5)
    fc_w = jax.random.uniform(next(ki), (O, H), jnp.float32, -fc_stdv, fc_stdv)
    fc_b = jax.random.uniform(next(ki), (O,), jnp.float32, -fc_stdv, fc_stdv)
    wfc_pad = jnp.zeros((1, HP), jnp.float32).at[:, :H].set(fc_w)   # O == 1
    bfc_pad = fc_b.reshape(1, 1)

    kernel_params = (wih0_bf, w01, w12, w2, bias_stack, wfc_pad, bfc_pad)
    torch_params = (torch_rnn, fc_w, fc_b)
    return kernel_params, torch_params


def ref_forward(x, torch_params):
    """Pure-JAX f32 reference mirroring the PyTorch forward (eval mode)."""
    torch_rnn, fc_w, fc_b = torch_params
    B, T, _ = x.shape
    layer_in = x.astype(jnp.float32)
    for (w_ih, w_hh, b_ih, b_hh) in torch_rnn:
        h = jnp.zeros((B, HIDDEN_DIM), jnp.float32)
        outs = []
        for t in range(T):
            h = jnp.tanh(layer_in[:, t] @ w_ih.T + b_ih + h @ w_hh.T + b_hh)
            outs.append(h)
        layer_in = jnp.stack(outs, axis=1)
    out = layer_in[:, -1:]                      # (B, 1, H)
    return out @ fc_w.T + fc_b                  # (B, 1, O)


if __name__ == "__main__":
    key = jax.random.PRNGKey(0)
    k_x, k_p = jax.random.split(key)

    B, T, D = 8, 8, 16                          # small shapes consistent with module
    x = jax.random.normal(k_x, (B, T, D), jnp.float32)

    kernel_params, torch_params = init_params(k_p, D)

    out = jax.block_until_ready(rnn_model_forward(x, kernel_params))
    assert out.shape == (B, 1, OUTPUT_DIM)

    ref = ref_forward(x, torch_params)
    # bf16 MXU operands with f32 accumulation -> loosened tolerance vs f32 ref.
    assert jnp.allclose(out, ref, atol=5e-2, rtol=5e-2), (out, ref)

    print("KERNEL_OK")
</pallas_src>

<mosaic_0001>
module attributes {stable_mosaic.version = 11 : i64} {
  func.func @rnn_kernel(%arg0: memref<64x16xbf16, #tpu.memory_space<vmem>>, %arg1: memref<16x128xbf16, #tpu.memory_space<vmem>>, %arg2: memref<128x256xbf16, #tpu.memory_space<vmem>>, %arg3: memref<128x256xbf16, #tpu.memory_space<vmem>>, %arg4: memref<128x128xbf16, #tpu.memory_space<vmem>>, %arg5: memref<3x1x128xf32, #tpu.memory_space<vmem>>, %arg6: memref<1x128xf32, #tpu.memory_space<vmem>>, %arg7: memref<1x1xf32, #tpu.memory_space<vmem>>, %arg8: memref<8x1xf32, #tpu.memory_space<vmem>>, %arg9: memref<64x128xf32, #tpu.memory_space<vmem>>) attributes {dimension_semantics = [], scalar_prefetch = 0 : i64, scratch_operands = 1 : i64, tpu.core_type = #tpu.core_type<tc>} {
    %c0 = arith.constant 0 : index
    %c0_0 = arith.constant 0 : index
    %0 = vector.load %arg0[%c0, %c0_0] : memref<64x16xbf16, #tpu.memory_space<vmem>>, vector<64x16xbf16>
    %c0_1 = arith.constant 0 : index
    %c0_2 = arith.constant 0 : index
    %1 = vector.load %arg1[%c0_1, %c0_2] : memref<16x128xbf16, #tpu.memory_space<vmem>>, vector<16x128xbf16>
    %cst = arith.constant dense<0.000000e+00> : vector<64x128xf32>
    %2 = tpu.matmul %0, %1, %cst {dimension_numbers = #tpu.dot_dimension_numbers<[1], [0], [0], [1], [0, 0, 1, 1], [], []>} : vector<64x16xbf16>, vector<16x128xbf16>, vector<64x128xf32> -> vector<64x128xf32>
    %c0_3 = arith.constant 0 : index
    %c0_4 = arith.constant 0 : index
    %c0_5 = arith.constant 0 : index
    %3 = vector.load %arg5[%c0_3, %c0_4, %c0_5] : memref<3x1x128xf32, #tpu.memory_space<vmem>>, vector<1x1x128xf32>
    %4 = vector.shape_cast %3 : vector<1x1x128xf32> to vector<1x128xf32>
    %5 = vector.broadcast %4 : vector<1x128xf32> to vector<64x128xf32>
    %6 = arith.addf %2, %5 : vector<64x128xf32>
    %c0_6 = arith.constant 0 : index
    %c0_7 = arith.constant 0 : index
    %7 = vector.load %arg9[%c0_6, %c0_7] : memref<64x128xf32, #tpu.memory_space<vmem>>, vector<64x128xf32>
    tpu.vector_store %arg9[%c0_6, %c0_7], %6 {strides = array<i32>} : memref<64x128xf32, #tpu.memory_space<vmem>>, vector<64x128xf32>,
    %c1 = arith.constant 1 : index
    %c0_8 = arith.constant 0 : index
    %c0_9 = arith.constant 0 : index
    %8 = vector.load %arg5[%c1, %c0_8, %c0_9] : memref<3x1x128xf32, #tpu.memory_space<vmem>>, vector<1x1x128xf32>
    %9 = vector.shape_cast %8 : vector<1x1x128xf32> to vector<1x128xf32>
    %c2 = arith.constant 2 : index
    %c0_10 = arith.constant 0 : index
    %c0_11 = arith.constant 0 : index
    %10 = vector.load %arg5[%c2, %c0_10, %c0_11] : memref<3x1x128xf32, #tpu.memory_space<vmem>>, vector<1x1x128xf32>
    %11 = vector.shape_cast %10 : vector<1x1x128xf32> to vector<1x128xf32>
    %c0_12 = arith.constant 0 : index
    %c0_13 = arith.constant 0 : index
    %12 = vector.load %arg9[%c0_12, %c0_13] : memref<64x128xf32, #tpu.memory_space<vmem>>, vector<8x128xf32>
    %13 = math.tanh %12 : vector<8x128xf32>
    %14 = arith.truncf %13 : vector<8x128xf32> to vector<8x128xbf16>
    %c0_14 = arith.constant 0 : index
    %c0_15 = arith.constant 0 : index
    %15 = vector.load %arg2[%c0_14, %c0_15] : memref<128x256xbf16, #tpu.memory_space<vmem>>, vector<128x256xbf16>
    %cst_16 = arith.constant dense<0.000000e+00> : vector<8x256xf32>
    %16 = tpu.matmul %14, %15, %cst_16 {dimension_numbers = #tpu.dot_dimension_numbers<[1], [0], [0], [1], [0, 0, 1, 1], [], []>} : vector<8x128xbf16>, vector<128x256xbf16>, vector<8x256xf32> -> vector<8x256xf32>
    %c8 = arith.constant 8 : index
    %c0_17 = arith.constant 0 : index
    %17 = vector.load %arg9[%c8, %c0_17] : memref<64x128xf32, #tpu.memory_space<vmem>>, vector<8x128xf32>
    %18 = vector.extract_strided_slice %16 {offsets = [0, 0], sizes = [8, 128], strides = [1, 1]} : vector<8x256xf32> to vector<8x128xf32>
    %19 = arith.addf %17, %18 : vector<8x128xf32>
    %20 = math.tanh %19 : vector<8x128xf32>
    %21 = vector.extract_strided_slice %16 {offsets = [0, 128], sizes = [8, 128], strides = [1, 1]} : vector<8x256xf32> to vector<8x128xf32>
    %22 = vector.broadcast %9 : vector<1x128xf32> to vector<8x128xf32>
    %23 = arith.addf %22, %21 : vector<8x128xf32>
    %24 = math.tanh %23 : vector<8x128xf32>
    %25 = arith.truncf %20 : vector<8x128xf32> to vector<8x128xbf16>
    %c0_18 = arith.constant 0 : index
    %c0_19 = arith.constant 0 : index
    %26 = vector.load %arg2[%c0_18, %c0_19] : memref<128x256xbf16, #tpu.memory_space<vmem>>, vector<128x256xbf16>
    %cst_20 = arith.constant dense<0.000000e+00> : vector<8x256xf32>
    %27 = tpu.matmul %25, %26, %cst_20 {dimension_numbers = #tpu.dot_dimension_numbers<[1], [0], [0], [1], [0, 0, 1, 1], [], []>} : vector<8x128xbf16>, vector<128x256xbf16>, vector<8x256xf32> -> vector<8x256xf32>
    %28 = arith.truncf %24 : vector<8x128xf32> to vector<8x128xbf16>
    %c0_21 = arith.constant 0 : index
    %c0_22 = arith.constant 0 : index
    %29 = vector.load %arg3[%c0_21, %c0_22] : memref<128x256xbf16, #tpu.memory_space<vmem>>, vector<128x256xbf16>
    %cst_23 = arith.constant dense<0.000000e+00> : vector<8x256xf32>
    %30 = tpu.matmul %28, %29, %cst_23 {dimension_numbers = #tpu.dot_dimension_numbers<[1], [0], [0], [1], [0, 0, 1, 1], [], []>} : vector<8x128xbf16>, vector<128x256xbf16>, vector<8x256xf32> -> vector<8x256xf32>
    %c16 = arith.constant 16 : index
    %c0_24 = arith.constant 0 : index
    %31 = vector.load %arg9[%c16, %c0_24] : memref<64x128xf32, #tpu.memory_space<vmem>>, vector<8x128xf32>
    %32 = vector.extract_strided_slice %27 {offsets = [0, 0], sizes = [8, 128], strides = [1, 1]} : vector<8x256xf32> to vector<8x128xf32>
    %33 = arith.addf %31, %32 : vector<8x128xf32>
    %34 = math.tanh %33 : vector<8x128xf32>
    %35 = vector.extract_strided_slice %27 {offsets = [0, 128], sizes = [8, 128], strides = [1, 1]} : vector<8x256xf32> to vector<8x128xf32>
    %36 = vector.broadcast %9 : vector<1x128xf32> to vector<8x128xf32>
    %37 = arith.addf %36, %35 : vector<8x128xf32>
    %38 = vector.extract_strided_slice %30 {offsets = [0, 0], sizes = [8, 128], strides = [1, 1]} : vector<8x256xf32> to vector<8x128xf32>
    %39 = arith.addf %37, %38 : vector<8x128xf32>
    %40 = math.tanh %39 : vector<8x128xf32>
    %41 = vector.extract_strided_slice %30 {offsets = [0, 128], sizes = [8, 128], strides = [1, 1]} : vector<8x256xf32> to vector<8x128xf32>
    %42 = vector.broadcast %11 : vector<1x128xf32> to vector<8x128xf32>
    %43 = arith.addf %42, %41 : vector<8x128xf32>
    %44 = math.tanh %43 : vector<8x128xf32>
    %45 = arith.truncf %34 : vector<8x128xf32> to vector<8x128xbf16>
    %c0_25 = arith.constant 0 : index
    %c0_26 = arith.constant 0 : index
    %46 = vector.load %arg2[%c0_25, %c0_26] : memref<128x256xbf16, #tpu.memory_space<vmem>>, vector<128x256xbf16>
    %cst_27 = arith.constant dense<0.000000e+00> : vector<8x256xf32>
    %47 = tpu.matmul %45, %46, %cst_27 {dimension_numbers = #tpu.dot_dimension_numbers<[1], [0], [0], [1], [0, 0, 1, 1], [], []>} : vector<8x128xbf16>, vector<128x256xbf16>, vector<8x256xf32> -> vector<8x256xf32>
    %48 = arith.truncf %40 : vector<8x128xf32> to vector<8x128xbf16>
    %c0_28 = arith.constant 0 : index
    %c0_29 = arith.constant 0 : index
    %49 = vector.load %arg3[%c0_28, %c0_29] : memref<128x256xbf16, #tpu.memory_space<vmem>>, vector<128x256xbf16>
    %cst_30 = arith.constant dense<0.000000e+00> : vector<8x256xf32>
    %50 = tpu.matmul %48, %49, %cst_30 {dimension_numbers = #tpu.dot_dimension_numbers<[1], [0], [0], [1], [0, 0, 1, 1], [], []>} : vector<8x128xbf16>, vector<128x256xbf16>, vector<8x256xf32> -> vector<8x256xf32>
    %51 = arith.truncf %44 : vector<8x128xf32> to vector<8x128xbf16>
    %c0_31 = arith.constant 0 : index
    %c0_32 = arith.constant 0 : index
    %52 = vector.load %arg4[%c0_31, %c0_32] : memref<128x128xbf16, #tpu.memory_space<vmem>>, vector<128x128xbf16>
    %cst_33 = arith.constant dense<0.000000e+00> : vector<8x128xf32>
    %53 = tpu.matmul %51, %52, %cst_33 {dimension_numbers = #tpu.dot_dimension_numbers<[1], [0], [0], [1], [0, 0, 1, 1], [], []>} : vector<8x128xbf16>, vector<128x128xbf16>, vector<8x128xf32> -> vector<8x128xf32>
    %c24 = arith.constant 24 : index
    %c0_34 = arith.constant 0 : index
    %54 = vector.load %arg9[%c24, %c0_34] : memref<64x128xf32, #tpu.memory_space<vmem>>, vector<8x128xf32>
    %55 = vector.extract_strided_slice %47 {offsets = [0, 0], sizes = [8, 128], strides = [1, 1]} : vector<8x256xf32> to vector<8x128xf32>
    %56 = arith.addf %54, %55 : vector<8x128xf32>
    %57 = math.tanh %56 : vector<8x128xf32>
    %58 = vector.extract_strided_slice %47 {offsets = [0, 128], sizes = [8, 128], strides = [1, 1]} : vector<8x256xf32> to vector<8x128xf32>
    %59 = vector.broadcast %9 : vector<1x128xf32> to vector<8x128xf32>
    %60 = arith.addf %59, %58 : vector<8x128xf32>
    %61 = vector.extract_strided_slice %50 {offsets = [0, 0], sizes = [8, 128], strides = [1, 1]} : vector<8x256xf32> to vector<8x128xf32>
    %62 = arith.addf %60, %61 : vector<8x128xf32>
    %63 = math.tanh %62 : vector<8x128xf32>
    %64 = vector.extract_strided_slice %50 {offsets = [0, 128], sizes = [8, 128], strides = [1, 1]} : vector<8x256xf32> to vector<8x128xf32>
    %65 = vector.broadcast %11 : vector<1x128xf32> to vector<8x128xf32>
    %66 = arith.addf %65, %64 : vector<8x128xf32>
    %67 = arith.addf %66, %53 : vector<8x128xf32>
    %68 = math.tanh %67 : vector<8x128xf32>
    %69 = arith.truncf %57 : vector<8x128xf32> to vector<8x128xbf16>
    %c0_35 = arith.constant 0 : index
    %c0_36 = arith.constant 0 : index
    %70 = vector.load %arg2[%c0_35, %c0_36] : memref<128x256xbf16, #tpu.memory_space<vmem>>, vector<128x256xbf16>
    %cst_37 = arith.constant dense<0.000000e+00> : vector<8x256xf32>
    %71 = tpu.matmul %69, %70, %cst_37 {dimension_numbers = #tpu.dot_dimension_numbers<[1], [0], [0], [1], [0, 0, 1, 1], [], []>} : vector<8x128xbf16>, vector<128x256xbf16>, vector<8x256xf32> -> vector<8x256xf32>
    %72 = arith.truncf %63 : vector<8x128xf32> to vector<8x128xbf16>
    %c0_38 = arith.constant 0 : index
    %c0_39 = arith.constant 0 : index
    %73 = vector.load %arg3[%c0_38, %c0_39] : memref<128x256xbf16, #tpu.memory_space<vmem>>, vector<128x256xbf16>
    %cst_40 = arith.constant dense<0.000000e+00> : vector<8x256xf32>
    %74 = tpu.matmul %72, %73, %cst_40 {dimension_numbers = #tpu.dot_dimension_numbers<[1], [0], [0], [1], [0, 0, 1, 1], [], []>} : vector<8x128xbf16>, vector<128x256xbf16>, vector<8x256xf32> -> vector<8x256xf32>
    %75 = arith.truncf %68 : vector<8x128xf32> to vector<8x128xbf16>
    %c0_41 = arith.constant 0 : index
    %c0_42 = arith.constant 0 : index
    %76 = vector.load %arg4[%c0_41, %c0_42] : memref<128x128xbf16, #tpu.memory_space<vmem>>, vector<128x128xbf16>
    %cst_43 = arith.constant dense<0.000000e+00> : vector<8x128xf32>
    %77 = tpu.matmul %75, %76, %cst_43 {dimension_numbers = #tpu.dot_dimension_numbers<[1], [0], [0], [1], [0, 0, 1, 1], [], []>} : vector<8x128xbf16>, vector<128x128xbf16>, vector<8x128xf32> -> vector<8x128xf32>
    %c32 = arith.constant 32 : index
    %c0_44 = arith.constant 0 : index
    %78 = vector.load %arg9[%c32, %c0_44] : memref<64x128xf32, #tpu.memory_space<vmem>>, vector<8x128xf32>
    %79 = vector.extract_strided_slice %71 {offsets = [0, 0], sizes = [8, 128], strides = [1, 1]} : vector<8x256xf32> to vector<8x128xf32>
    %80 = arith.addf %78, %79 : vector<8x128xf32>
    %81 = math.tanh %80 : vector<8x128xf32>
    %82 = vector.extract_strided_slice %71 {offsets = [0, 128], sizes = [8, 128], strides = [1, 1]} : vector<8x256xf32> to vector<8x128xf32>
    %83 = vector.broadcast %9 : vector<1x128xf32> to vector<8x128xf32>
    %84 = arith.addf %83, %82 : vector<8x128xf32>
    %85 = vector.extract_strided_slice %74 {offsets = [0, 0], sizes = [8, 128], strides = [1, 1]} : vector<8x256xf32> to vector<8x128xf32>
    %86 = arith.addf %84, %85 : vector<8x128xf32>
    %87 = math.tanh %86 : vector<8x128xf32>
    %88 = vector.extract_strided_slice %74 {offsets = [0, 128], sizes = [8, 128], strides = [1, 1]} : vector<8x256xf32> to vector<8x128xf32>
    %89 = vector.broadcast %11 : vector<1x128xf32> to vector<8x128xf32>
    %90 = arith.addf %89, %88 : vector<8x128xf32>
    %91 = arith.addf %90, %77 : vector<8x128xf32>
    %92 = math.tanh %91 : vector<8x128xf32>
    %93 = arith.truncf %81 : vector<8x128xf32> to vector<8x128xbf16>
    %c0_45 = arith.constant 0 : index
    %c0_46 = arith.constant 0 : index
    %94 = vector.load %arg2[%c0_45, %c0_46] : memref<128x256xbf16, #tpu.memory_space<vmem>>, vector<128x256xbf16>
    %cst_47 = arith.constant dense<0.000000e+00> : vector<8x256xf32>
    %95 = tpu.matmul %93, %94, %cst_47 {dimension_numbers = #tpu.dot_dimension_numbers<[1], [0], [0], [1], [0, 0, 1, 1], [], []>} : vector<8x128xbf16>, vector<128x256xbf16>, vector<8x256xf32> -> vector<8x256xf32>
    %96 = arith.truncf %87 : vector<8x128xf32> to vector<8x128xbf16>
    %c0_48 = arith.constant 0 : index
    %c0_49 = arith.constant 0 : index
    %97 = vector.load %arg3[%c0_48, %c0_49] : memref<128x256xbf16, #tpu.memory_space<vmem>>, vector<128x256xbf16>
    %cst_50 = arith.constant dense<0.000000e+00> : vector<8x256xf32>
    %98 = tpu.matmul %96, %97, %cst_50 {dimension_numbers = #tpu.dot_dimension_numbers<[1], [0], [0], [1], [0, 0, 1, 1], [], []>} : vector<8x128xbf16>, vector<128x256xbf16>, vector<8x256xf32> -> vector<8x256xf32>
    %99 = arith.truncf %92 : vector<8x128xf32> to vector<8x128xbf16>
    %c0_51 = arith.constant 0 : index
    %c0_52 = arith.constant 0 : index
    %100 = vector.load %arg4[%c0_51, %c0_52] : memref<128x128xbf16, #tpu.memory_space<vmem>>, vector<128x128xbf16>
    %cst_53 = arith.constant dense<0.000000e+00> : vector<8x128xf32>
    %101 = tpu.matmul %99, %100, %cst_53 {dimension_numbers = #tpu.dot_dimension_numbers<[1], [0], [0], [1], [0, 0, 1, 1], [], []>} : vector<8x128xbf16>, vector<128x128xbf16>, vector<8x128xf32> -> vector<8x128xf32>
    %c40 = arith.constant 40 : index
    %c0_54 = arith.constant 0 : index
    %102 = vector.load %arg9[%c40, %c0_54] : memref<64x128xf32, #tpu.memory_space<vmem>>, vector<8x128xf32>
    %103 = vector.extract_strided_slice %95 {offsets = [0, 0], sizes = [8, 128], strides = [1, 1]} : vector<8x256xf32> to vector<8x128xf32>
    %104 = arith.addf %102, %103 : vector<8x128xf32>
    %105 = math.tanh %104 : vector<8x128xf32>
    %106 = vector.extract_strided_slice %95 {offsets = [0, 128], sizes = [8, 128], strides = [1, 1]} : vector<8x256xf32> to vector<8x128xf32>
    %107 = vector.broadcast %9 : vector<1x128xf32> to vector<8x128xf32>
    %108 = arith.addf %107, %106 : vector<8x128xf32>
    %109 = vector.extract_strided_slice %98 {offsets = [0, 0], sizes = [8, 128], strides = [1, 1]} : vector<8x256xf32> to vector<8x128xf32>
    %110 = arith.addf %108, %109 : vector<8x128xf32>
    %111 = math.tanh %110 : vector<8x128xf32>
    %112 = vector.extract_strided_slice %98 {offsets = [0, 128], sizes = [8, 128], strides = [1, 1]} : vector<8x256xf32> to vector<8x128xf32>
    %113 = vector.broadcast %11 : vector<1x128xf32> to vector<8x128xf32>
    %114 = arith.addf %113, %112 : vector<8x128xf32>
    %115 = arith.addf %114, %101 : vector<8x128xf32>
    %116 = math.tanh %115 : vector<8x128xf32>
    %117 = arith.truncf %105 : vector<8x128xf32> to vector<8x128xbf16>
    %c0_55 = arith.constant 0 : index
    %c0_56 = arith.constant 0 : index
    %118 = vector.load %arg2[%c0_55, %c0_56] : memref<128x256xbf16, #tpu.memory_space<vmem>>, vector<128x256xbf16>
    %cst_57 = arith.constant dense<0.000000e+00> : vector<8x256xf32>
    %119 = tpu.matmul %117, %118, %cst_57 {dimension_numbers = #tpu.dot_dimension_numbers<[1], [0], [0], [1], [0, 0, 1, 1], [], []>} : vector<8x128xbf16>, vector<128x256xbf16>, vector<8x256xf32> -> vector<8x256xf32>
    %120 = arith.truncf %111 : vector<8x128xf32> to vector<8x128xbf16>
    %c0_58 = arith.constant 0 : index
    %c0_59 = arith.constant 0 : index
    %121 = vector.load %arg3[%c0_58, %c0_59] : memref<128x256xbf16, #tpu.memory_space<vmem>>, vector<128x256xbf16>
    %cst_60 = arith.constant dense<0.000000e+00> : vector<8x256xf32>
    %122 = tpu.matmul %120, %121, %cst_60 {dimension_numbers = #tpu.dot_dimension_numbers<[1], [0], [0], [1], [0, 0, 1, 1], [], []>} : vector<8x128xbf16>, vector<128x256xbf16>, vector<8x256xf32> -> vector<8x256xf32>
    %123 = arith.truncf %116 : vector<8x128xf32> to vector<8x128xbf16>
    %c0_61 = arith.constant 0 : index
    %c0_62 = arith.constant 0 : index
    %124 = vector.load %arg4[%c0_61, %c0_62] : memref<128x128xbf16, #tpu.memory_space<vmem>>, vector<128x128xbf16>
    %cst_63 = arith.constant dense<0.000000e+00> : vector<8x128xf32>
    %125 = tpu.matmul %123, %124, %cst_63 {dimension_numbers = #tpu.dot_dimension_numbers<[1], [0], [0], [1], [0, 0, 1, 1], [], []>} : vector<8x128xbf16>, vector<128x128xbf16>, vector<8x128xf32> -> vector<8x128xf32>
    %c48 = arith.constant 48 : index
    %c0_64 = arith.constant 0 : index
    %126 = vector.load %arg9[%c48, %c0_64] : memref<64x128xf32, #tpu.memory_space<vmem>>, vector<8x128xf32>
    %127 = vector.extract_strided_slice %119 {offsets = [0, 0], sizes = [8, 128], strides = [1, 1]} : vector<8x256xf32> to vector<8x128xf32>
    %128 = arith.addf %126, %127 : vector<8x128xf32>
    %129 = math.tanh %128 : vector<8x128xf32>
    %130 = vector.extract_strided_slice %119 {offsets = [0, 128], sizes = [8, 128], strides = [1, 1]} : vector<8x256xf32> to vector<8x128xf32>
    %131 = vector.broadcast %9 : vector<1x128xf32> to vector<8x128xf32>
    %132 = arith.addf %131, %130 : vector<8x128xf32>
    %133 = vector.extract_strided_slice %122 {offsets = [0, 0], sizes = [8, 128], strides = [1, 1]} : vector<8x256xf32> to vector<8x128xf32>
    %134 = arith.addf %132, %133 : vector<8x128xf32>
    %135 = math.tanh %134 : vector<8x128xf32>
    %136 = vector.extract_strided_slice %122 {offsets = [0, 128], sizes = [8, 128], strides = [1, 1]} : vector<8x256xf32> to vector<8x128xf32>
    %137 = vector.broadcast %11 : vector<1x128xf32> to vector<8x128xf32>
    %138 = arith.addf %137, %136 : vector<8x128xf32>
    %139 = arith.addf %138, %125 : vector<8x128xf32>
    %140 = math.tanh %139 : vector<8x128xf32>
    %141 = arith.truncf %129 : vector<8x128xf32> to vector<8x128xbf16>
    %c0_65 = arith.constant 0 : index
    %c0_66 = arith.constant 0 : index
    %142 = vector.load %arg2[%c0_65, %c0_66] : memref<128x256xbf16, #tpu.memory_space<vmem>>, vector<128x256xbf16>
    %cst_67 = arith.constant dense<0.000000e+00> : vector<8x256xf32>
    %143 = tpu.matmul %141, %142, %cst_67 {dimension_numbers = #tpu.dot_dimension_numbers<[1], [0], [0], [1], [0, 0, 1, 1], [], []>} : vector<8x128xbf16>, vector<128x256xbf16>, vector<8x256xf32> -> vector<8x256xf32>
    %144 = arith.truncf %135 : vector<8x128xf32> to vector<8x128xbf16>
    %c0_68 = arith.constant 0 : index
    %c0_69 = arith.constant 0 : index
    %145 = vector.load %arg3[%c0_68, %c0_69] : memref<128x256xbf16, #tpu.memory_space<vmem>>, vector<128x256xbf16>
    %cst_70 = arith.constant dense<0.000000e+00> : vector<8x256xf32>
    %146 = tpu.matmul %144, %145, %cst_70 {dimension_numbers = #tpu.dot_dimension_numbers<[1], [0], [0], [1], [0, 0, 1, 1], [], []>} : vector<8x128xbf16>, vector<128x256xbf16>, vector<8x256xf32> -> vector<8x256xf32>
    %147 = arith.truncf %140 : vector<8x128xf32> to vector<8x128xbf16>
    %c0_71 = arith.constant 0 : index
    %c0_72 = arith.constant 0 : index
    %148 = vector.load %arg4[%c0_71, %c0_72] : memref<128x128xbf16, #tpu.memory_space<vmem>>, vector<128x128xbf16>
    %cst_73 = arith.constant dense<0.000000e+00> : vector<8x128xf32>
    %149 = tpu.matmul %147, %148, %cst_73 {dimension_numbers = #tpu.dot_dimension_numbers<[1], [0], [0], [1], [0, 0, 1, 1], [], []>} : vector<8x128xbf16>, vector<128x128xbf16>, vector<8x128xf32> -> vector<8x128xf32>
    %c56 = arith.constant 56 : index
    %c0_74 = arith.constant 0 : index
    %150 = vector.load %arg9[%c56, %c0_74] : memref<64x128xf32, #tpu.memory_space<vmem>>, vector<8x128xf32>
    %151 = vector.extract_strided_slice %143 {offsets = [0, 0], sizes = [8, 128], strides = [1, 1]} : vector<8x256xf32> to vector<8x128xf32>
    %152 = arith.addf %150, %151 : vector<8x128xf32>
    %153 = math.tanh %152 : vector<8x128xf32>
    %154 = vector.extract_strided_slice %143 {offsets = [0, 128], sizes = [8, 128], strides = [1, 1]} : vector<8x256xf32> to vector<8x128xf32>
    %155 = vector.broadcast %9 : vector<1x128xf32> to vector<8x128xf32>
    %156 = arith.addf %155, %154 : vector<8x128xf32>
    %157 = vector.extract_strided_slice %146 {offsets = [0, 0], sizes = [8, 128], strides = [1, 1]} : vector<8x256xf32> to vector<8x128xf32>
    %158 = arith.addf %156, %157 : vector<8x128xf32>
    %159 = math.tanh %158 : vector<8x128xf32>
    %160 = vector.extract_strided_slice %146 {offsets = [0, 128], sizes = [8, 128], strides = [1, 1]} : vector<8x256xf32> to vector<8x128xf32>
    %161 = vector.broadcast %11 : vector<1x128xf32> to vector<8x128xf32>
    %162 = arith.addf %161, %160 : vector<8x128xf32>
    %163 = arith.addf %162, %149 : vector<8x128xf32>
    %164 = math.tanh %163 : vector<8x128xf32>
    %165 = arith.truncf %153 : vector<8x128xf32> to vector<8x128xbf16>
    %c0_75 = arith.constant 0 : index
    %c0_76 = arith.constant 0 : index
    %166 = vector.load %arg2[%c0_75, %c0_76] : memref<128x256xbf16, #tpu.memory_space<vmem>>, vector<128x256xbf16>
    %cst_77 = arith.constant dense<0.000000e+00> : vector<8x256xf32>
    %167 = tpu.matmul %165, %166, %cst_77 {dimension_numbers = #tpu.dot_dimension_numbers<[1], [0], [0], [1], [0, 0, 1, 1], [], []>} : vector<8x128xbf16>, vector<128x256xbf16>, vector<8x256xf32> -> vector<8x256xf32>
    %168 = arith.truncf %159 : vector<8x128xf32> to vector<8x128xbf16>
    %c0_78 = arith.constant 0 : index
    %c0_79 = arith.constant 0 : index
    %169 = vector.load %arg3[%c0_78, %c0_79] : memref<128x256xbf16, #tpu.memory_space<vmem>>, vector<128x256xbf16>
    %cst_80 = arith.constant dense<0.000000e+00> : vector<8x256xf32>
    %170 = tpu.matmul %168, %169, %cst_80 {dimension_numbers = #tpu.dot_dimension_numbers<[1], [0], [0], [1], [0, 0, 1, 1], [], []>} : vector<8x128xbf16>, vector<128x256xbf16>, vector<8x256xf32> -> vector<8x256xf32>
    %171 = arith.truncf %164 : vector<8x128xf32> to vector<8x128xbf16>
    %c0_81 = arith.constant 0 : index
    %c0_82 = arith.constant 0 : index
    %172 = vector.load %arg4[%c0_81, %c0_82] : memref<128x128xbf16, #tpu.memory_space<vmem>>, vector<128x128xbf16>
    %cst_83 = arith.constant dense<0.000000e+00> : vector<8x128xf32>
    %173 = tpu.matmul %171, %172, %cst_83 {dimension_numbers = #tpu.dot_dimension_numbers<[1], [0], [0], [1], [0, 0, 1, 1], [], []>} : vector<8x128xbf16>, vector<128x128xbf16>, vector<8x128xf32> -> vector<8x128xf32>
    %174 = vector.extract_strided_slice %167 {offsets = [0, 128], sizes = [8, 128], strides = [1, 1]} : vector<8x256xf32> to vector<8x128xf32>
    %175 = vector.broadcast %9 : vector<1x128xf32> to vector<8x128xf32>
    %176 = arith.addf %175, %174 : vector<8x128xf32>
    %177 = vector.extract_strided_slice %170 {offsets = [0, 0], sizes = [8, 128], strides = [1, 1]} : vector<8x256xf32> to vector<8x128xf32>
    %178 = arith.addf %176, %177 : vector<8x128xf32>
    %179 = math.tanh %178 : vector<8x128xf32>
    %180 = vector.extract_strided_slice %170 {offsets = [0, 128], sizes = [8, 128], strides = [1, 1]} : vector<8x256xf32> to vector<8x128xf32>
    %181 = vector.broadcast %11 : vector<1x128xf32> to vector<8x128xf32>
    %182 = arith.addf %181, %180 : vector<8x128xf32>
    %183 = arith.addf %182, %173 : vector<8x128xf32>
    %184 = math.tanh %183 : vector<8x128xf32>
    %185 = arith.truncf %179 : vector<8x128xf32> to vector<8x128xbf16>
    %c0_84 = arith.constant 0 : index
    %c0_85 = arith.constant 0 : index
    %186 = vector.load %arg3[%c0_84, %c0_85] : memref<128x256xbf16, #tpu.memory_space<vmem>>, vector<128x256xbf16>
    %cst_86 = arith.constant dense<0.000000e+00> : vector<8x256xf32>
    %187 = tpu.matmul %185, %186, %cst_86 {dimension_numbers = #tpu.dot_dimension_numbers<[1], [0], [0], [1], [0, 0, 1, 1], [], []>} : vector<8x128xbf16>, vector<128x256xbf16>, vector<8x256xf32> -> vector<8x256xf32>
    %188 = arith.truncf %184 : vector<8x128xf32> to vector<8x128xbf16>
    %c0_87 = arith.constant 0 : index
    %c0_88 = arith.constant 0 : index
    %189 = vector.load %arg4[%c0_87, %c0_88] : memref<128x128xbf16, #tpu.memory_space<vmem>>, vector<128x128xbf16>
    %cst_89 = arith.constant dense<0.000000e+00> : vector<8x128xf32>
    %190 = tpu.matmul %188, %189, %cst_89 {dimension_numbers = #tpu.dot_dimension_numbers<[1], [0], [0], [1], [0, 0, 1, 1], [], []>} : vector<8x128xbf16>, vector<128x128xbf16>, vector<8x128xf32> -> vector<8x128xf32>
    %191 = vector.extract_strided_slice %187 {offsets = [0, 128], sizes = [8, 128], strides = [1, 1]} : vector<8x256xf32> to vector<8x128xf32>
    %192 = vector.broadcast %11 : vector<1x128xf32> to vector<8x128xf32>
    %193 = arith.addf %192, %191 : vector<8x128xf32>
    %194 = arith.addf %193, %190 : vector<8x128xf32>
    %195 = math.tanh %194 : vector<8x128xf32>
    %c0_90 = arith.constant 0 : index
    %c0_91 = arith.constant 0 : index
    %196 = vector.load %arg6[%c0_90, %c0_91] : memref<1x128xf32, #tpu.memory_space<vmem>>, vector<1x128xf32>
    %197 = vector.broadcast %196 : vector<1x128xf32> to vector<8x128xf32>
    %198 = arith.mulf %195, %197 : vector<8x128xf32>
    %cst_92 = arith.constant dense<0.000000e+00> : vector<8xf32>
    %199 = vector.multi_reduction <add>, %198, %cst_92 [1] : vector<8x128xf32> to vector<8xf32>
    %200 = vector.shape_cast %199 : vector<8xf32> to vector<8x1xf32>
    %c0_93 = arith.constant 0 : index
    %c0_94 = arith.constant 0 : index
    %201 = vector.load %arg7[%c0_93, %c0_94] : memref<1x1xf32, #tpu.memory_space<vmem>>, vector<1x1xf32>
    %202 = vector.broadcast %201 : vector<1x1xf32> to vector<8x1xf32>
    %203 = arith.addf %200, %202 : vector<8x1xf32>
    %c0_95 = arith.constant 0 : index
    %c0_96 = arith.constant 0 : index
    %204 = vector.load %arg8[%c0_95, %c0_96] : memref<8x1xf32, #tpu.memory_space<vmem>>, vector<8x1xf32>
    tpu.vector_store %arg8[%c0_95, %c0_96], %203 {strides = array<i32>} : memref<8x1xf32, #tpu.memory_space<vmem>>, vector<8x1xf32>,
    return
  }
}

</mosaic_0001>

<llo_original>
// kernel: rnn_model_forward.1
$region0: #{rnn_model_forward.1}
  #allocation0 [shape = 'u32[]', space=smem, size = 0x4, offset = 0x4, fixed_abs, tag = 'smem constant byte address 0x4 - core index']
  #allocation1 [shape = 'u32[144,128]{1,0:T(1,128)}', space=vmem, size = 0x12000, scoped, tag = 'internal scratch']
  #allocation2 [shape = 'f32[64,128]{1,0:T(8,128)}', space=vmem, size = 0x8000, scoped, tag = 'scratch operand']
  #allocation3 [shape = 'f32[1,1]{1,0:T(1,128)S(1)}', space=vmem, size = 0x200, scoped, tag = 'scoped memory for rnn_model_forward.1']
  %s0 = inlined_call_operand.vmem [shape: bf16[64,16], index: 0, kind: input, shape index: {}]
  %s1 = inlined_call_operand.vmem [shape: bf16[16,128], index: 1, kind: input, shape index: {}]
  %s2 = inlined_call_operand.vmem [shape: bf16[128,256], index: 2, kind: input, shape index: {}]
  %s3 = inlined_call_operand.hbm [shape: bf16[128,256], index: 3, kind: input, shape index: {}]
  %s4 = inlined_call_operand.hbm [shape: bf16[128,128], index: 4, kind: input, shape index: {}]
  %s5 = inlined_call_operand.vmem [shape: f32[3,1,128], index: 5, kind: input, shape index: {}]
  %s6 = inlined_call_operand.vmem [shape: f32[1,128], index: 6, kind: input, shape index: {}]
  %s7 = inlined_call_operand.<no memory space> [shape: f32[1,1], index: 7, kind: input, shape index: {}]
  %s8 = inlined_call_operand.vmem [shape: f32[8,1], index: 8, kind: output, shape index: {}]
  %s9 = sld [smem:[#allocation0]]
  $region50: #{rnn_model_forward.1} parent=0
    _
  %s11 = ssub.s32 1, %s9
  %s12 = scalar_select 0, %s11, %s9
  %v13 = vstv %s7
  %14 = vst [vmem:[#allocation3] sm:$0x1] %v13
  $region1: #{rnn_model_forward.1} parent=0
    #allocation4 [shape = 'u8[65536]{0}', space=vmem, size = 0x10000, scoped, tag = 'input window, operand 3, single buffered']
    #allocation5 [shape = 's32[1]{0}', space=sflag, size = 0x4, scoped, tag = 'scoped memory for rnn_model_forward.1']
    #allocation6 [shape = 'u8[32768]{0}', space=vmem, size = 0x8000, scoped, tag = 'input window, operand 4, single buffered']
    #allocation7 [shape = 's32[1]{0}', space=sflag, size = 0x4, scoped, tag = 'scoped memory for rnn_model_forward.1']
    %15 = vsyncpa [#allocation5], 0
    %16 = vsyncpa [#allocation7], 0
    // Predicated region
    $region2: #{rnn_model_forward.1} parent=1 // pred_check
      _
    $region3: #{rnn_model_forward.1} parent=1 // pred_check_branch
      %18 = sbr.rel (0) target = $region5
    $region4: #{rnn_model_forward.1} parent=1 // pred_region
      _
    $region5: #{rnn_model_forward.1} parent=1 // pred_fallthru
      _
    // Predicated region
    $region6: #{rnn_model_forward.1} parent=1 // pred_check
      _
    $region7: #{rnn_model_forward.1} parent=1 // pred_check_branch
      %20 = sbr.rel (0) target = $region9
    $region8: #{rnn_model_forward.1} parent=1 // pred_region
      _
    $region9: #{rnn_model_forward.1} parent=1 // pred_fallthru
      _
    // Predicated region
    $region10: #{rnn_model_forward.1} parent=1 // pred_check
      _
    $region11: #{rnn_model_forward.1} parent=1 // pred_check_branch
      %22 = sbr.rel (0) target = $region13
    $region12: #{rnn_model_forward.1} parent=1 // pred_region
      _
    $region13: #{rnn_model_forward.1} parent=1 // pred_fallthru
      _
    // Predicated region
    $region14: #{rnn_model_forward.1} parent=1 // pred_check
      _
    $region15: #{rnn_model_forward.1} parent=1 // pred_check_branch
      %24 = sbr.rel (0) target = $region17
    $region16: #{rnn_model_forward.1} parent=1 // pred_region
      %s26 = ssub.s32 2048, 2048
      %27 = vsyncadd [#allocation5], %s26
      %s28 = sshll.u32 [#allocation4], 4
      %s29 = int_to_ptr.vmem [resolvable:$true] %s28
      %34 = dma.hbm_to_vmem [thread:$0]  %s3, 2048, %s29, [#allocation5], 128, 128, 8
    $region17: #{rnn_model_forward.1} parent=1 // pred_fallthru
      _
    // Predicated region
    $region18: #{rnn_model_forward.1} parent=1 // pred_check
      _
    $region19: #{rnn_model_forward.1} parent=1 // pred_check_branch
      %36 = sbr.rel (0) target = $region21
    $region20: #{rnn_model_forward.1} parent=1 // pred_region
      %s38 = ssub.s32 1024, 1024
      %39 = vsyncadd [#allocation7], %s38
      %s40 = sshll.u32 [#allocation6], 4
      %s41 = int_to_ptr.vmem [resolvable:$true] %s40
      %46 = dma.hbm_to_vmem [thread:$0]  %s4, 1024, %s41, [#allocation7], 64, 64, 4
    $region21: #{rnn_model_forward.1} parent=1 // pred_fallthru
      _
    // Predicated region
    $region22: #{rnn_model_forward.1} parent=1 // pred_check
      _
    $region23: #{rnn_model_forward.1} parent=1 // pred_check_branch
      %48 = sbr.rel (0) target = $region25
    $region24: #{rnn_model_forward.1} parent=1 // pred_region
      _
    $region25: #{rnn_model_forward.1} parent=1 // pred_fallthru
      _
    // Predicated region
    $region26: #{rnn_model_forward.1} parent=1 // pred_check
      _
    $region27: #{rnn_model_forward.1} parent=1 // pred_check_branch
      %50 = sbr.rel (0) target = $region29
    $region28: #{rnn_model_forward.1} parent=1 // pred_region
      _
    $region29: #{rnn_model_forward.1} parent=1 // pred_fallthru
      _
    // Predicated region
    $region30: #{rnn_model_forward.1} parent=1 // pred_check
      _
    $region31: #{rnn_model_forward.1} parent=1 // pred_check_branch
      %52 = sbr.rel (0) target = $region33
    $region32: #{rnn_model_forward.1} parent=1 // pred_region
      _
    $region33: #{rnn_model_forward.1} parent=1 // pred_fallthru
      _
    // Predicated region
    $region34: #{rnn_model_forward.1} parent=1 // pred_check
      _
    $region35: #{rnn_model_forward.1} parent=1 // pred_check_branch
      %54 = sbr.rel (0) target = $region37
    $region36: #{rnn_model_forward.1} parent=1 // pred_region
      %55 = dma.done [#allocation5], 2048
    $region37: #{rnn_model_forward.1} parent=1 // pred_fallthru
      _
    // Predicated region
    $region38: #{rnn_model_forward.1} parent=1 // pred_check
      _
    $region39: #{rnn_model_forward.1} parent=1 // pred_check_branch
      %57 = sbr.rel (0) target = $region41
    $region40: #{rnn_model_forward.1} parent=1 // pred_region
      %58 = dma.done [#allocation7], 1024
    $region41: #{rnn_model_forward.1} parent=1 // pred_fallthru
      _
    %v60 = vld [vmem:[%s0] sm:$0xf]
    %v61 = vld [vmem:[%s0 + $0x4] sm:$0xf]
    %v62 = vld [vmem:[%s0 + $0x8] sm:$0xf]
    %v63 = vld [vmem:[%s0 + $0xc] sm:$0xf]
    %v64 = vld [vmem:[%s0 + $0x10] sm:$0xf]
    %v65 = vld [vmem:[%s0 + $0x14] sm:$0xf]
    %v66 = vld [vmem:[%s0 + $0x18] sm:$0xf]
    %v67 = vld [vmem:[%s0 + $0x1c] sm:$0xf]
    %v68 = vld [vmem:[%s1] sm:$0xf]
    %v69 = vld [vmem:[%s1 + $0x4] sm:$0xf]
    %v70 = vld [vmem:[%s5] sm:$0x1]
    %v72 = vlaneseq
    %v73 = vshrl.u32 %v72, 7
    %v74 = vsub.s32 0, %v73
    %v75 = vrot.slane %v70, %v74
    %v85 = vunpack.c.l.b16 %v60
    %v86 = vunpack.c.l.b16 %v61
    %v87 = vunpack.c.l.b16 %v62
    %v88 = vunpack.c.l.b16 %v63
    %v89 = vunpack.c.l.b16 %v64
    %v90 = vunpack.c.l.b16 %v65
    %v91 = vunpack.c.l.b16 %v66
    %v92 = vunpack.c.l.b16 %v67
    %v93 = vpack.c.b16 %v86, %v85
    %v94 = vpack.c.b16 %v88, %v87
    %v95 = vpack.c.b16 %v90, %v89
    %v96 = vpack.c.b16 %v92, %v91
    %v99 = vunpack.c.l.b16 %v68
    %v100 = vunpack.c.l.b16 %v69
    %v101 = vpack.c.b16 %v100, %v99
    %vm103 = vcmask 130048
    %v105 = vsel %vm103, %v93, 0
    %v108 = vsel %vm103, %v94, 0
    %v111 = vsel %vm103, %v95, 0
    %v114 = vsel %vm103, %v96, 0
    %116 = vmatprep.subr.bf16.mxu0 0
    %117 = vmatpush1.bf16.msra.mxu0 %v101
    %118 = vmatprep.subr.bf16.mxu0 0
    %119 = vmatpush1.bf16.msra.mxu0 0
    %120 = vmatprep.subr.bf16.mxu0 0
    %121 = vmatpush1.bf16.msra.mxu0 0
    %122 = vmatprep.subr.bf16.mxu0 0
    %123 = vmatpush1.bf16.msra.mxu0 0
    %124 = vmatprep.subr.bf16.mxu0 0
    %125 = vmatpush1.bf16.msra.mxu0 0
    %126 = vmatprep.subr.bf16.mxu0 0
    %127 = vmatpush1.bf16.msra.mxu0 0
    %128 = vmatprep.subr.bf16.mxu0 0
    %129 = vmatpush1.bf16.msra.mxu0 0
    %130 = vmatprep.subr.bf16.mxu0 0
    %131 = vmatpush1.bf16.msra.mxu0 0
    %132 = vmatprep.subr.bf16.mxu0 0
    %133 = vmatpush1.bf16.msra.mxu0 0
    %134 = vmatprep.subr.bf16.mxu0 0
    %135 = vmatpush1.bf16.msra.mxu0 0
    %136 = vmatprep.subr.bf16.mxu0 0
    %137 = vmatpush1.bf16.msra.mxu0 0
    %138 = vmatprep.subr.bf16.mxu0 0
    %139 = vmatpush1.bf16.msra.mxu0 0
    %140 = vmatprep.subr.bf16.mxu0 0
    %141 = vmatpush1.bf16.msra.mxu0 0
    %142 = vmatprep.subr.bf16.mxu0 0
    %143 = vmatpush1.bf16.msra.mxu0 0
    %144 = vmatprep.subr.bf16.mxu0 0
    %145 = vmatpush1.bf16.msra.mxu0 0
    %146 = vmatprep.subr.bf16.mxu0 0
    %147 = vmatpush1.bf16.msra.mxu0 0
    %148 = vmatprep.mubr.bf16.mxu0 0
    %149 = vmatmul.mubr.bf16.gmra.mrb[0].mxu0 %v105
    %v150 = vpop.f32.mrb[0].mxu0
    %v151 = vadd.f32 %v75, %v150
    %v152 = vpop.f32.mrb[0].mxu0
    %v153 = vpop.f32.mrb[0].mxu0
    %v154 = vadd.f32 %v75, %v153
    %v155 = vpop.f32.mrb[0].mxu0
    %156 = vmatprep.mubr.bf16.mxu0 0
    %157 = vmatmul.mubr.bf16.gmra.mrb[0].mxu0 %v108
    %v158 = vpop.f32.mrb[0].mxu0
    %v159 = vadd.f32 %v75, %v158
    %v160 = vpop.f32.mrb[0].mxu0
    %v161 = vpop.f32.mrb[0].mxu0
    %v162 = vadd.f32 %v75, %v161
    %v163 = vpop.f32.mrb[0].mxu0
    %164 = vmatprep.mubr.bf16.mxu0 0
    %165 = vmatmul.mubr.bf16.gmra.mrb[0].mxu0 %v111
    %v166 = vpop.f32.mrb[0].mxu0
    %v167 = vadd.f32 %v75, %v166
    %v168 = vpop.f32.mrb[0].mxu0
    %v169 = vpop.f32.mrb[0].mxu0
    %v170 = vadd.f32 %v75, %v169
    %v171 = vpop.f32.mrb[0].mxu0
    %172 = vmatprep.mubr.bf16.mxu0 0
    %173 = vmatmul.mubr.bf16.gmra.mrb[0].mxu0 %v114
    %v174 = vpop.f32.mrb[0].mxu0
    %v175 = vadd.f32 %v75, %v174
    %v176 = vpop.f32.mrb[0].mxu0
    %v177 = vpop.f32.mrb[0].mxu0
    %v178 = vadd.f32 %v75, %v177
    %v179 = vpop.f32.mrb[0].mxu0
    %180 = vdwg.mxu0
    %181 = vst [vmem:[#allocation2] sm:$0xff] %v151
    %182 = vst [vmem:[#allocation2 + $0x8] sm:$0xff] %v154
    %183 = vst [vmem:[#allocation2 + $0x10] sm:$0xff] %v159
    %184 = vst [vmem:[#allocation2 + $0x18] sm:$0xff] %v162
    %185 = vst [vmem:[#allocation2 + $0x20] sm:$0xff] %v167
    %186 = vst [vmem:[#allocation2 + $0x28] sm:$0xff] %v170
    %187 = vst [vmem:[#allocation2 + $0x30] sm:$0xff] %v175
    %188 = vst [vmem:[#allocation2 + $0x38] sm:$0xff] %v178
    %s189 = scalar_lea.vmem %s5, 1
    %v190 = vld [vmem:[%s189] sm:$0x1]
    %s191 = scalar_lea.vmem %s5, 2
    %v192 = vld [vmem:[%s191] sm:$0x1]
    %v193 = vld [vmem:[#allocation2] sm:$0xff]
    %v194 = vtanh.pop %v193
    %v195 = vpack.c.bf16 %v194, %v194
    %v196 = vld [vmem:[%s2] sm:$0xff]
    %v197 = vld [vmem:[%s2 + $0x8] sm:$0xff]
    %v198 = vld [vmem:[%s2 + $0x10] sm:$0xff]
    %v199 = vld [vmem:[%s2 + $0x18] sm:$0xff]
    %v200 = vld [vmem:[%s2 + $0x20] sm:$0xff]
    %v201 = vld [vmem:[%s2 + $0x28] sm:$0xff]
    %v202 = vld [vmem:[%s2 + $0x30] sm:$0xff]
    %v203 = vld [vmem:[%s2 + $0x38] sm:$0xff]
    %v204 = vld [vmem:[%s2 + $0x40] sm:$0xff]
    %v205 = vld [vmem:[%s2 + $0x48] sm:$0xff]
    %v206 = vld [vmem:[%s2 + $0x50] sm:$0xff]
    %v207 = vld [vmem:[%s2 + $0x58] sm:$0xff]
    %v208 = vld [vmem:[%s2 + $0x60] sm:$0xff]
    %v209 = vld [vmem:[%s2 + $0x68] sm:$0xff]
    %v210 = vld [vmem:[%s2 + $0x70] sm:$0xff]
    %v211 = vld [vmem:[%s2 + $0x78] sm:$0xff]
    %v228 = vunpack.c.l.b16 %v196
    %v229 = vunpack.c.h.b16 %v196
    %v230 = vunpack.c.l.b16 %v197
    %v231 = vunpack.c.h.b16 %v197
    %v232 = vunpack.c.l.b16 %v198
    %v233 = vunpack.c.h.b16 %v198
    %v234 = vunpack.c.l.b16 %v199
    %v235 = vunpack.c.h.b16 %v199
    %v236 = vunpack.c.l.b16 %v200
    %v237 = vunpack.c.h.b16 %v200
    %v238 = vunpack.c.l.b16 %v201
    %v239 = vunpack.c.h.b16 %v201
    %v240 = vunpack.c.l.b16 %v202
    %v241 = vunpack.c.h.b16 %v202
    %v242 = vunpack.c.l.b16 %v203
    %v243 = vunpack.c.h.b16 %v203
    %v244 = vunpack.c.l.b16 %v204
    %v245 = vunpack.c.h.b16 %v204
    %v246 = vunpack.c.l.b16 %v205
    %v247 = vunpack.c.h.b16 %v205
    %v248 = vunpack.c.l.b16 %v206
    %v249 = vunpack.c.h.b16 %v206
    %v250 = vunpack.c.l.b16 %v207
    %v251 = vunpack.c.h.b16 %v207
    %v252 = vunpack.c.l.b16 %v208
    %v253 = vunpack.c.h.b16 %v208
    %v254 = vunpack.c.l.b16 %v209
    %v255 = vunpack.c.h.b16 %v209
    %v256 = vunpack.c.l.b16 %v210
    %v257 = vunpack.c.h.b16 %v210
    %v258 = vunpack.c.l.b16 %v211
    %v259 = vunpack.c.h.b16 %v211
    %v260 = vpack.c.b16 %v230, %v228
    %v261 = vpack.c.b16 %v231, %v229
    %v262 = vpack.c.b16 %v234, %v232
    %v263 = vpack.c.b16 %v235, %v233
    %v264 = vpack.c.b16 %v238, %v236
    %v265 = vpack.c.b16 %v239, %v237
    %v266 = vpack.c.b16 %v242, %v240
    %v267 = vpack.c.b16 %v243, %v241
    %v268 = vpack.c.b16 %v246, %v244
    %v269 = vpack.c.b16 %v247, %v245
    %v270 = vpack.c.b16 %v250, %v248
    %v271 = vpack.c.b16 %v251, %v249
    %v272 = vpack.c.b16 %v254, %v252
    %v273 = vpack.c.b16 %v255, %v253
    %v274 = vpack.c.b16 %v258, %v256
    %v275 = vpack.c.b16 %v259, %v257
    %292 = vmatprep.subr.bf16.mxu0 %v261
    %293 = vmatpush1.bf16.msra.mxu0 %v260
    %294 = vmatprep.subr.bf16.mxu0 %v263
    %295 = vmatpush1.bf16.msra.mxu0 %v262
    %296 = vmatprep.subr.bf16.mxu0 %v265
    %297 = vmatpush1.bf16.msra.mxu0 %v264
    %298 = vmatprep.subr.bf16.mxu0 %v267
    %299 = vmatpush1.bf16.msra.mxu0 %v266
    %300 = vmatprep.subr.bf16.mxu0 %v269
    %301 = vmatpush1.bf16.msra.mxu0 %v268
    %302 = vmatprep.subr.bf16.mxu0 %v271
    %303 = vmatpush1.bf16.msra.mxu0 %v270
    %304 = vmatprep.subr.bf16.mxu0 %v273
    %305 = vmatpush1.bf16.msra.mxu0 %v272
    %306 = vmatprep.subr.bf16.mxu0 %v275
    %307 = vmatpush1.bf16.msra.mxu0 %v274
    %308 = vmatprep.subr.bf16.mxu0 0
    %309 = vmatpush1.bf16.msra.mxu0 0
    %310 = vmatprep.subr.bf16.mxu0 0
    %311 = vmatpush1.bf16.msra.mxu0 0
    %312 = vmatprep.subr.bf16.mxu0 0
    %313 = vmatpush1.bf16.msra.mxu0 0
    %314 = vmatprep.subr.bf16.mxu0 0
    %315 = vmatpush1.bf16.msra.mxu0 0
    %316 = vmatprep.subr.bf16.mxu0 0
    %317 = vmatpush1.bf16.msra.mxu0 0
    %318 = vmatprep.subr.bf16.mxu0 0
    %319 = vmatpush1.bf16.msra.mxu0 0
    %320 = vmatprep.subr.bf16.mxu0 0
    %321 = vmatpush1.bf16.msra.mxu0 0
    %322 = vmatprep.subr.bf16.mxu0 0
    %323 = vmatpush1.bf16.msra.mxu0 0
    %324 = vmatprep.mubr.bf16.mxu0 0
    %325 = vmatmul.mubr.bf16.gmra.mrb[0].mxu0 %v195
    %v326 = vpop.f32.mrb[0].mxu0
    %v327 = vadd.f32 0.0, %v326
    %v328 = vpop.f32.mrb[0].mxu0
    %v329 = vadd.f32 0.0, %v328
    %v330 = vpop.f32.mrb[0].mxu0
    %v331 = vpop.f32.mrb[0].mxu0
    %332 = vdwg.mxu0
    %v333 = vld [vmem:[#allocation2 + $0x8] sm:$0xff]
    %v334 = vadd.f32 %v333, %v327
    %v335 = vtanh.pop %v334
    %v337 = vlaneseq
    %v338 = vshrl.u32 %v337, 7
    %v339 = vsub.s32 0, %v338
    %v340 = vrot.slane %v190, %v339
    %v342 = vadd.f32 %v340, %v329
    %v343 = vtanh.pop %v342
    %v344 = vpack.c.bf16 %v335, %v335
    %345 = vmatprep.subr.bf16.mxu0 %v261
    %346 = vmatpush1.bf16.msra.mxu0 %v260
    %347 = vmatprep.subr.bf16.mxu0 %v263
    %348 = vmatpush1.bf16.msra.mxu0 %v262
    %349 = vmatprep.subr.bf16.mxu0 %v265
    %350 = vmatpush1.bf16.msra.mxu0 %v264
    %351 = vmatprep.subr.bf16.mxu0 %v267
    %352 = vmatpush1.bf16.msra.mxu0 %v266
    %353 = vmatprep.subr.bf16.mxu0 %v269
    %354 = vmatpush1.bf16.msra.mxu0 %v268
    %355 = vmatprep.subr.bf16.mxu0 %v271
    %356 = vmatpush1.bf16.msra.mxu0 %v270
    %357 = vmatprep.subr.bf16.mxu0 %v273
    %358 = vmatpush1.bf16.msra.mxu0 %v272
    %359 = vmatprep.subr.bf16.mxu0 %v275
    %360 = vmatpush1.bf16.msra.mxu0 %v274
    %361 = vmatprep.subr.bf16.mxu0 0
    %362 = vmatpush1.bf16.msra.mxu0 0
    %363 = vmatprep.subr.bf16.mxu0 0
    %364 = vmatpush1.bf16.msra.mxu0 0
    %365 = vmatprep.subr.bf16.mxu0 0
    %366 = vmatpush1.bf16.msra.mxu0 0
    %367 = vmatprep.subr.bf16.mxu0 0
    %368 = vmatpush1.bf16.msra.mxu0 0
    %369 = vmatprep.subr.bf16.mxu0 0
    %370 = vmatpush1.bf16.msra.mxu0 0
    %371 = vmatprep.subr.bf16.mxu0 0
    %372 = vmatpush1.bf16.msra.mxu0 0
    %373 = vmatprep.subr.bf16.mxu0 0
    %374 = vmatpush1.bf16.msra.mxu0 0
    %375 = vmatprep.subr.bf16.mxu0 0
    %376 = vmatpush1.bf16.msra.mxu0 0
    %377 = vmatprep.mubr.bf16.mxu0 0
    %378 = vmatmul.mubr.bf16.gmra.mrb[0].mxu0 %v344
    %v379 = vpop.f32.mrb[0].mxu0
    %v380 = vadd.f32 0.0, %v379
    %v381 = vpop.f32.mrb[0].mxu0
    %v382 = vadd.f32 0.0, %v381
    %v383 = vpop.f32.mrb[0].mxu0
    %v384 = vpop.f32.mrb[0].mxu0
    %385 = vdwg.mxu0
    %v386 = vpack.c.bf16 %v343, %v343
    %v387 = vld [vmem:[#allocation4] sm:$0xff]
    %v388 = vld [vmem:[#allocation4 + $0x8] sm:$0xff]
    %v389 = vld [vmem:[#allocation4 + $0x10] sm:$0xff]
    %v390 = vld [vmem:[#allocation4 + $0x18] sm:$0xff]
    %v391 = vld [vmem:[#allocation4 + $0x20] sm:$0xff]
    %v392 = vld [vmem:[#allocation4 + $0x28] sm:$0xff]
    %v393 = vld [vmem:[#allocation4 + $0x30] sm:$0xff]
    %v394 = vld [vmem:[#allocation4 + $0x38] sm:$0xff]
    %v395 = vld [vmem:[#allocation4 + $0x40] sm:$0xff]
    %v396 = vld [vmem:[#allocation4 + $0x48] sm:$0xff]
    %v397 = vld [vmem:[#allocation4 + $0x50] sm:$0xff]
    %v398 = vld [vmem:[#allocation4 + $0x58] sm:$0xff]
    %v399 = vld [vmem:[#allocation4 + $0x60] sm:$0xff]
    %v400 = vld [vmem:[#allocation4 + $0x68] sm:$0xff]
    %v401 = vld [vmem:[#allocation4 + $0x70] sm:$0xff]
    %v402 = vld [vmem:[#allocation4 + $0x78] sm:$0xff]
    %v419 = vunpack.c.l.b16 %v387
    %v420 = vunpack.c.h.b16 %v387
    %v421 = vunpack.c.l.b16 %v388
    %v422 = vunpack.c.h.b16 %v388
    %v423 = vunpack.c.l.b16 %v389
    %v424 = vunpack.c.h.b16 %v389
    %v425 = vunpack.c.l.b16 %v390
    %v426 = vunpack.c.h.b16 %v390
    %v427 = vunpack.c.l.b16 %v391
    %v428 = vunpack.c.h.b16 %v391
    %v429 = vunpack.c.l.b16 %v392
    %v430 = vunpack.c.h.b16 %v392
    %v431 = vunpack.c.l.b16 %v393
    %v432 = vunpack.c.h.b16 %v393
    %v433 = vunpack.c.l.b16 %v394
    %v434 = vunpack.c.h.b16 %v394
    %v435 = vunpack.c.l.b16 %v395
    %v436 = vunpack.c.h.b16 %v395
    %v437 = vunpack.c.l.b16 %v396
    %v438 = vunpack.c.h.b16 %v396
    %v439 = vunpack.c.l.b16 %v397
    %v440 = vunpack.c.h.b16 %v397
    %v441 = vunpack.c.l.b16 %v398
    %v442 = vunpack.c.h.b16 %v398
    %v443 = vunpack.c.l.b16 %v399
    %v444 = vunpack.c.h.b16 %v399
    %v445 = vunpack.c.l.b16 %v400
    %v446 = vunpack.c.h.b16 %v400
    %v447 = vunpack.c.l.b16 %v401
    %v448 = vunpack.c.h.b16 %v401
    %v449 = vunpack.c.l.b16 %v402
    %v450 = vunpack.c.h.b16 %v402
    %v451 = vpack.c.b16 %v421, %v419
    %v452 = vpack.c.b16 %v422, %v420
    %v453 = vpack.c.b16 %v425, %v423
    %v454 = vpack.c.b16 %v426, %v424
    %v455 = vpack.c.b16 %v429, %v427
    %v456 = vpack.c.b16 %v430, %v428
    %v457 = vpack.c.b16 %v433, %v431
    %v458 = vpack.c.b16 %v434, %v432
    %v459 = vpack.c.b16 %v437, %v435
    %v460 = vpack.c.b16 %v438, %v436
    %v461 = vpack.c.b16 %v441, %v439
    %v462 = vpack.c.b16 %v442, %v440
    %v463 = vpack.c.b16 %v445, %v443
    %v464 = vpack.c.b16 %v446, %v444
    %v465 = vpack.c.b16 %v449, %v447
    %v466 = vpack.c.b16 %v450, %v448
    %483 = vmatprep.subr.bf16.mxu0 %v452
    %484 = vmatpush1.bf16.msra.mxu0 %v451
    %485 = vmatprep.subr.bf16.mxu0 %v454
    %486 = vmatpush1.bf16.msra.mxu0 %v453
    %487 = vmatprep.subr.bf16.mxu0 %v456
    %488 = vmatpush1.bf16.msra.mxu0 %v455
    %489 = vmatprep.subr.bf16.mxu0 %v458
    %490 = vmatpush1.bf16.msra.mxu0 %v457
    %491 = vmatprep.subr.bf16.mxu0 %v460
    %492 = vmatpush1.bf16.msra.mxu0 %v459
    %493 = vmatprep.subr.bf16.mxu0 %v462
    %494 = vmatpush1.bf16.msra.mxu0 %v461
    %495 = vmatprep.subr.bf16.mxu0 %v464
    %496 = vmatpush1.bf16.msra.mxu0 %v463
    %497 = vmatprep.subr.bf16.mxu0 %v466
    %498 = vmatpush1.bf16.msra.mxu0 %v465
    %499 = vmatprep.subr.bf16.mxu0 0
    %500 = vmatpush1.bf16.msra.mxu0 0
    %501 = vmatprep.subr.bf16.mxu0 0
    %502 = vmatpush1.bf16.msra.mxu0 0
    %503 = vmatprep.subr.bf16.mxu0 0
    %504 = vmatpush1.bf16.msra.mxu0 0
    %505 = vmatprep.subr.bf16.mxu0 0
    %506 = vmatpush1.bf16.msra.mxu0 0
    %507 = vmatprep.subr.bf16.mxu0 0
    %508 = vmatpush1.bf16.msra.mxu0 0
    %509 = vmatprep.subr.bf16.mxu0 0
    %510 = vmatpush1.bf16.msra.mxu0 0
    %511 = vmatprep.subr.bf16.mxu0 0
    %512 = vmatpush1.bf16.msra.mxu0 0
    %513 = vmatprep.subr.bf16.mxu0 0
    %514 = vmatpush1.bf16.msra.mxu0 0
    %515 = vmatprep.mubr.bf16.mxu0 0
    %516 = vmatmul.mubr.bf16.gmra.mrb[0].mxu0 %v386
    %v517 = vpop.f32.mrb[0].mxu0
    %v518 = vadd.f32 0.0, %v517
    %v519 = vpop.f32.mrb[0].mxu0
    %v520 = vadd.f32 0.0, %v519
    %v521 = vpop.f32.mrb[0].mxu0
    %v522 = vpop.f32.mrb[0].mxu0
    %523 = vdwg.mxu0
    %v524 = vld [vmem:[#allocation2 + $0x10] sm:$0xff]
    %v525 = vadd.f32 %v524, %v380
    %v526 = vtanh.pop %v525
    %v527 = vadd.f32 %v340, %v382
    %v528 = vadd.f32 %v527, %v518
    %v529 = vtanh.pop %v528
    %v531 = vlaneseq
    %v532 = vshrl.u32 %v531, 7
    %v533 = vsub.s32 0, %v532
    %v534 = vrot.slane %v192, %v533
    %v536 = vadd.f32 %v534, %v520
    %v537 = vtanh.pop %v536
    %v538 = vpack.c.bf16 %v526, %v526
    %539 = vmatprep.subr.bf16.mxu0 %v261
    %540 = vmatpush1.bf16.msra.mxu0 %v260
    %541 = vmatprep.subr.bf16.mxu0 %v263
    %542 = vmatpush1.bf16.msra.mxu0 %v262
    %543 = vmatprep.subr.bf16.mxu0 %v265
    %544 = vmatpush1.bf16.msra.mxu0 %v264
    %545 = vmatprep.subr.bf16.mxu0 %v267
    %546 = vmatpush1.bf16.msra.mxu0 %v266
    %547 = vmatprep.subr.bf16.mxu0 %v269
    %548 = vmatpush1.bf16.msra.mxu0 %v268
    %549 = vmatprep.subr.bf16.mxu0 %v271
    %550 = vmatpush1.bf16.msra.mxu0 %v270
    %551 = vmatprep.subr.bf16.mxu0 %v273
    %552 = vmatpush1.bf16.msra.mxu0 %v272
    %553 = vmatprep.subr.bf16.mxu0 %v275
    %554 = vmatpush1.bf16.msra.mxu0 %v274
    %555 = vmatprep.subr.bf16.mxu0 0
    %556 = vmatpush1.bf16.msra.mxu0 0
    %557 = vmatprep.subr.bf16.mxu0 0
    %558 = vmatpush1.bf16.msra.mxu0 0
    %559 = vmatprep.subr.bf16.mxu0 0
    %560 = vmatpush1.bf16.msra.mxu0 0
    %561 = vmatprep.subr.bf16.mxu0 0
    %562 = vmatpush1.bf16.msra.mxu0 0
    %563 = vmatprep.subr.bf16.mxu0 0
    %564 = vmatpush1.bf16.msra.mxu0 0
    %565 = vmatprep.subr.bf16.mxu0 0
    %566 = vmatpush1.bf16.msra.mxu0 0
    %567 = vmatprep.subr.bf16.mxu0 0
    %568 = vmatpush1.bf16.msra.mxu0 0
    %569 = vmatprep.subr.bf16.mxu0 0
    %570 = vmatpush1.bf16.msra.mxu0 0
    %571 = vmatprep.mubr.bf16.mxu0 0
    %572 = vmatmul.mubr.bf16.gmra.mrb[0].mxu0 %v538
    %v573 = vpop.f32.mrb[0].mxu0
    %v574 = vadd.f32 0.0, %v573
    %v575 = vpop.f32.mrb[0].mxu0
    %v576 = vadd.f32 0.0, %v575
    %v577 = vpop.f32.mrb[0].mxu0
    %v578 = vpop.f32.mrb[0].mxu0
    %579 = vdwg.mxu0
    %v580 = vpack.c.bf16 %v529, %v529
    %581 = vmatprep.subr.bf16.mxu0 %v452
    %582 = vmatpush1.bf16.msra.mxu0 %v451
    %583 = vmatprep.subr.bf16.mxu0 %v454
    %584 = vmatpush1.bf16.msra.mxu0 %v453
    %585 = vmatprep.subr.bf16.mxu0 %v456
    %586 = vmatpush1.bf16.msra.mxu0 %v455
    %587 = vmatprep.subr.bf16.mxu0 %v458
    %588 = vmatpush1.bf16.msra.mxu0 %v457
    %589 = vmatprep.subr.bf16.mxu0 %v460
    %590 = vmatpush1.bf16.msra.mxu0 %v459
    %591 = vmatprep.subr.bf16.mxu0 %v462
    %592 = vmatpush1.bf16.msra.mxu0 %v461
    %593 = vmatprep.subr.bf16.mxu0 %v464
    %594 = vmatpush1.bf16.msra.mxu0 %v463
    %595 = vmatprep.subr.bf16.mxu0 %v466
    %596 = vmatpush1.bf16.msra.mxu0 %v465
    %597 = vmatprep.subr.bf16.mxu0 0
    %598 = vmatpush1.bf16.msra.mxu0 0
    %599 = vmatprep.subr.bf16.mxu0 0
    %600 = vmatpush1.bf16.msra.mxu0 0
    %601 = vmatprep.subr.bf16.mxu0 0
    %602 = vmatpush1.bf16.msra.mxu0 0
    %603 = vmatprep.subr.bf16.mxu0 0
    %604 = vmatpush1.bf16.msra.mxu0 0
    %605 = vmatprep.subr.bf16.mxu0 0
    %606 = vmatpush1.bf16.msra.mxu0 0
    %607 = vmatprep.subr.bf16.mxu0 0
    %608 = vmatpush1.bf16.msra.mxu0 0
    %609 = vmatprep.subr.bf16.mxu0 0
    %610 = vmatpush1.bf16.msra.mxu0 0
    %611 = vmatprep.subr.bf16.mxu0 0
    %612 = vmatpush1.bf16.msra.mxu0 0
    %613 = vmatprep.mubr.bf16.mxu0 0
    %614 = vmatmul.mubr.bf16.gmra.mrb[0].mxu0 %v580
    %v615 = vpop.f32.mrb[0].mxu0
    %v616 = vadd.f32 0.0, %v615
    %v617 = vpop.f32.mrb[0].mxu0
    %v618 = vadd.f32 0.0, %v617
    %v619 = vpop.f32.mrb[0].mxu0
    %v620 = vpop.f32.mrb[0].mxu0
    %621 = vdwg.mxu0
    %v622 = vpack.c.bf16 %v537, %v537
    %v623 = vld [vmem:[#allocation6] sm:$0xf]
    %v624 = vld [vmem:[#allocation6 + $0x4] sm:$0xf]
    %v625 = vld [vmem:[#allocation6 + $0x8] sm:$0xf]
    %v626 = vld [vmem:[#allocation6 + $0xc] sm:$0xf]
    %v627 = vld [vmem:[#allocation6 + $0x10] sm:$0xf]
    %v628 = vld [vmem:[#allocation6 + $0x14] sm:$0xf]
    %v629 = vld [vmem:[#allocation6 + $0x18] sm:$0xf]
    %v630 = vld [vmem:[#allocation6 + $0x1c] sm:$0xf]
    %v631 = vld [vmem:[#allocation6 + $0x20] sm:$0xf]
    %v632 = vld [vmem:[#allocation6 + $0x24] sm:$0xf]
    %v633 = vld [vmem:[#allocation6 + $0x28] sm:$0xf]
    %v634 = vld [vmem:[#allocation6 + $0x2c] sm:$0xf]
    %v635 = vld [vmem:[#allocation6 + $0x30] sm:$0xf]
    %v636 = vld [vmem:[#allocation6 + $0x34] sm:$0xf]
    %v637 = vld [vmem:[#allocation6 + $0x38] sm:$0xf]
    %v638 = vld [vmem:[#allocation6 + $0x3c] sm:$0xf]
    %v655 = vunpack.c.l.b16 %v623
    %v656 = vunpack.c.l.b16 %v624
    %v657 = vunpack.c.l.b16 %v625
    %v658 = vunpack.c.l.b16 %v626
    %v659 = vunpack.c.l.b16 %v627
    %v660 = vunpack.c.l.b16 %v628
    %v661 = vunpack.c.l.b16 %v629
    %v662 = vunpack.c.l.b16 %v630
    %v663 = vunpack.c.l.b16 %v631
    %v664 = vunpack.c.l.b16 %v632
    %v665 = vunpack.c.l.b16 %v633
    %v666 = vunpack.c.l.b16 %v634
    %v667 = vunpack.c.l.b16 %v635
    %v668 = vunpack.c.l.b16 %v636
    %v669 = vunpack.c.l.b16 %v637
    %v670 = vunpack.c.l.b16 %v638
    %v671 = vpack.c.b16 %v656, %v655
    %v672 = vpack.c.b16 %v658, %v657
    %v673 = vpack.c.b16 %v660, %v659
    %v674 = vpack.c.b16 %v662, %v661
    %v675 = vpack.c.b16 %v664, %v663
    %v676 = vpack.c.b16 %v666, %v665
    %v677 = vpack.c.b16 %v668, %v667
    %v678 = vpack.c.b16 %v670, %v669
    %687 = vmatprep.subr.bf16.mxu0 0
    %688 = vmatpush1.bf16.msra.mxu0 %v671
    %689 = vmatprep.subr.bf16.mxu0 0
    %690 = vmatpush1.bf16.msra.mxu0 %v672
    %691 = vmatprep.subr.bf16.mxu0 0
    %692 = vmatpush1.bf16.msra.mxu0 %v673
    %693 = vmatprep.subr.bf16.mxu0 0
    %694 = vmatpush1.bf16.msra.mxu0 %v674
    %695 = vmatprep.subr.bf16.mxu0 0
    %696 = vmatpush1.bf16.msra.mxu0 %v675
    %697 = vmatprep.subr.bf16.mxu0 0
    %698 = vmatpush1.bf16.msra.mxu0 %v676
    %699 = vmatprep.subr.bf16.mxu0 0
    %700 = vmatpush1.bf16.msra.mxu0 %v677
    %701 = vmatprep.subr.bf16.mxu0 0
    %702 = vmatpush1.bf16.msra.mxu0 %v678
    %703 = vmatprep.subr.bf16.mxu0 0
    %704 = vmatpush1.bf16.msra.mxu0 0
    %705 = vmatprep.subr.bf16.mxu0 0
    %706 = vmatpush1.bf16.msra.mxu0 0
    %707 = vmatprep.subr.bf16.mxu0 0
    %708 = vmatpush1.bf16.msra.mxu0 0
    %709 = vmatprep.subr.bf16.mxu0 0
    %710 = vmatpush1.bf16.msra.mxu0 0
    %711 = vmatprep.subr.bf16.mxu0 0
    %712 = vmatpush1.bf16.msra.mxu0 0
    %713 = vmatprep.subr.bf16.mxu0 0
    %714 = vmatpush1.bf16.msra.mxu0 0
    %715 = vmatprep.subr.bf16.mxu0 0
    %716 = vmatpush1.bf16.msra.mxu0 0
    %717 = vmatprep.subr.bf16.mxu0 0
    %718 = vmatpush1.bf16.msra.mxu0 0
    %719 = vmatprep.mubr.bf16.mxu0 0
    %720 = vmatmul.mubr.bf16.gmra.mrb[0].mxu0 %v622
    %v721 = vpop.f32.mrb[0].mxu0
    %v722 = vadd.f32 0.0, %v721
    %v723 = vpop.f32.mrb[0].mxu0
    %v724 = vpop.f32.mrb[0].mxu0
    %v725 = vpop.f32.mrb[0].mxu0
    %726 = vdwg.mxu0
    %v727 = vld [vmem:[#allocation2 + $0x18] sm:$0xff]
    %v728 = vadd.f32 %v727, %v574
    %v729 = vtanh.pop %v728
    %v730 = vadd.f32 %v340, %v576
    %v731 = vadd.f32 %v730, %v616
    %v732 = vtanh.pop %v731
    %v733 = vadd.f32 %v534, %v618
    %v734 = vadd.f32 %v733, %v722
    %v735 = vtanh.pop %v734
    %v736 = vpack.c.bf16 %v729, %v729
    %737 = vmatprep.subr.bf16.mxu0 %v261
    %738 = vmatpush1.bf16.msra.mxu0 %v260
    %739 = vmatprep.subr.bf16.mxu0 %v263
    %740 = vmatpush1.bf16.msra.mxu0 %v262
    %741 = vmatprep.subr.bf16.mxu0 %v265
    %742 = vmatpush1.bf16.msra.mxu0 %v264
    %743 = vmatprep.subr.bf16.mxu0 %v267
    %744 = vmatpush1.bf16.msra.mxu0 %v266
    %745 = vmatprep.subr.bf16.mxu0 %v269
    %746 = vmatpush1.bf16.msra.mxu0 %v268
    %747 = vmatprep.subr.bf16.mxu0 %v271
    %748 = vmatpush1.bf16.msra.mxu0 %v270
    %749 = vmatprep.subr.bf16.mxu0 %v273
    %750 = vmatpush1.bf16.msra.mxu0 %v272
    %751 = vmatprep.subr.bf16.mxu0 %v275
    %752 = vmatpush1.bf16.msra.mxu0 %v274
    %753 = vmatprep.subr.bf16.mxu0 0
    %754 = vmatpush1.bf16.msra.mxu0 0
    %755 = vmatprep.subr.bf16.mxu0 0
    %756 = vmatpush1.bf16.msra.mxu0 0
    %757 = vmatprep.subr.bf16.mxu0 0
    %758 = vmatpush1.bf16.msra.mxu0 0
    %759 = vmatprep.subr.bf16.mxu0 0
    %760 = vmatpush1.bf16.msra.mxu0 0
    %761 = vmatprep.subr.bf16.mxu0 0
    %762 = vmatpush1.bf16.msra.mxu0 0
    %763 = vmatprep.subr.bf16.mxu0 0
    %764 = vmatpush1.bf16.msra.mxu0 0
    %765 = vmatprep.subr.bf16.mxu0 0
    %766 = vmatpush1.bf16.msra.mxu0 0
    %767 = vmatprep.subr.bf16.mxu0 0
    %768 = vmatpush1.bf16.msra.mxu0 0
    %769 = vmatprep.mubr.bf16.mxu0 0
    %770 = vmatmul.mubr.bf16.gmra.mrb[0].mxu0 %v736
    %v771 = vpop.f32.mrb[0].mxu0
    %v772 = vadd.f32 0.0, %v771
    %v773 = vpop.f32.mrb[0].mxu0
    %v774 = vadd.f32 0.0, %v773
    %v775 = vpop.f32.mrb[0].mxu0
    %v776 = vpop.f32.mrb[0].mxu0
    %777 = vdwg.mxu0
    %v778 = vpack.c.bf16 %v732, %v732
    %779 = vmatprep.subr.bf16.mxu0 %v452
    %780 = vmatpush1.bf16.msra.mxu0 %v451
    %781 = vmatprep.subr.bf16.mxu0 %v454
    %782 = vmatpush1.bf16.msra.mxu0 %v453
    %783 = vmatprep.subr.bf16.mxu0 %v456
    %784 = vmatpush1.bf16.msra.mxu0 %v455
    %785 = vmatprep.subr.bf16.mxu0 %v458
    %786 = vmatpush1.bf16.msra.mxu0 %v457
    %787 = vmatprep.subr.bf16.mxu0 %v460
    %788 = vmatpush1.bf16.msra.mxu0 %v459
    %789 = vmatprep.subr.bf16.mxu0 %v462
    %790 = vmatpush1.bf16.msra.mxu0 %v461
    %791 = vmatprep.subr.bf16.mxu0 %v464
    %792 = vmatpush1.bf16.msra.mxu0 %v463
    %793 = vmatprep.subr.bf16.mxu0 %v466
    %794 = vmatpush1.bf16.msra.mxu0 %v465
    %795 = vmatprep.subr.bf16.mxu0 0
    %796 = vmatpush1.bf16.msra.mxu0 0
    %797 = vmatprep.subr.bf16.mxu0 0
    %798 = vmatpush1.bf16.msra.mxu0 0
    %799 = vmatprep.subr.bf16.mxu0 0
    %800 = vmatpush1.bf16.msra.mxu0 0
    %801 = vmatprep.subr.bf16.mxu0 0
    %802 = vmatpush1.bf16.msra.mxu0 0
    %803 = vmatprep.subr.bf16.mxu0 0
    %804 = vmatpush1.bf16.msra.mxu0 0
    %805 = vmatprep.subr.bf16.mxu0 0
    %806 = vmatpush1.bf16.msra.mxu0 0
    %807 = vmatprep.subr.bf16.mxu0 0
    %808 = vmatpush1.bf16.msra.mxu0 0
    %809 = vmatprep.subr.bf16.mxu0 0
    %810 = vmatpush1.bf16.msra.mxu0 0
    %811 = vmatprep.mubr.bf16.mxu0 0
    %812 = vmatmul.mubr.bf16.gmra.mrb[0].mxu0 %v778
    %v813 = vpop.f32.mrb[0].mxu0
    %v814 = vadd.f32 0.0, %v813
    %v815 = vpop.f32.mrb[0].mxu0
    %v816 = vadd.f32 0.0, %v815
    %v817 = vpop.f32.mrb[0].mxu0
    %v818 = vpop.f32.mrb[0].mxu0
    %819 = vdwg.mxu0
    %v820 = vpack.c.bf16 %v735, %v735
    %821 = vmatprep.subr.bf16.mxu0 0
    %822 = vmatpush1.bf16.msra.mxu0 %v671
    %823 = vmatprep.subr.bf16.mxu0 0
    %824 = vmatpush1.bf16.msra.mxu0 %v672
    %825 = vmatprep.subr.bf16.mxu0 0
    %826 = vmatpush1.bf16.msra.mxu0 %v673
    %827 = vmatprep.subr.bf16.mxu0 0
    %828 = vmatpush1.bf16.msra.mxu0 %v674
    %829 = vmatprep.subr.bf16.mxu0 0
    %830 = vmatpush1.bf16.msra.mxu0 %v675
    %831 = vmatprep.subr.bf16.mxu0 0
    %832 = vmatpush1.bf16.msra.mxu0 %v676
    %833 = vmatprep.subr.bf16.mxu0 0
    %834 = vmatpush1.bf16.msra.mxu0 %v677
    %835 = vmatprep.subr.bf16.mxu0 0
    %836 = vmatpush1.bf16.msra.mxu0 %v678
    %837 = vmatprep.subr.bf16.mxu0 0
    %838 = vmatpush1.bf16.msra.mxu0 0
    %839 = vmatprep.subr.bf16.mxu0 0
    %840 = vmatpush1.bf16.msra.mxu0 0
    %841 = vmatprep.subr.bf16.mxu0 0
    %842 = vmatpush1.bf16.msra.mxu0 0
    %843 = vmatprep.subr.bf16.mxu0 0
    %844 = vmatpush1.bf16.msra.mxu0 0
    %845 = vmatprep.subr.bf16.mxu0 0
    %846 = vmatpush1.bf16.msra.mxu0 0
    %847 = vmatprep.subr.bf16.mxu0 0
    %848 = vmatpush1.bf16.msra.mxu0 0
    %849 = vmatprep.subr.bf16.mxu0 0
    %850 = vmatpush1.bf16.msra.mxu0 0
    %851 = vmatprep.subr.bf16.mxu0 0
    %852 = vmatpush1.bf16.msra.mxu0 0
    %853 = vmatprep.mubr.bf16.mxu0 0
    %854 = vmatmul.mubr.bf16.gmra.mrb[0].mxu0 %v820
    %v855 = vpop.f32.mrb[0].mxu0
    %v856 = vadd.f32 0.0, %v855
    %v857 = vpop.f32.mrb[0].mxu0
    %v858 = vpop.f32.mrb[0].mxu0
    %v859 = vpop.f32.mrb[0].mxu0
    %860 = vdwg.mxu0
    %v861 = vld [vmem:[#allocation2 + $0x20] sm:$0xff]
    %v862 = vadd.f32 %v861, %v772
    %v863 = vtanh.pop %v862
    %v864 = vadd.f32 %v340, %v774
    %v865 = vadd.f32 %v864, %v814
    %v866 = vtanh.pop %v865
    %v867 = vadd.f32 %v534, %v816
    %v868 = vadd.f32 %v867, %v856
    %v869 = vtanh.pop %v868
    %v870 = vpack.c.bf16 %v863, %v863
    %871 = vmatprep.subr.bf16.mxu0 %v261
    %872 = vmatpush1.bf16.msra.mxu0 %v260
    %873 = vmatprep.subr.bf16.mxu0 %v263
    %874 = vmatpush1.bf16.msra.mxu0 %v262
    %875 = vmatprep.subr.bf16.mxu0 %v265
    %876 = vmatpush1.bf16.msra.mxu0 %v264
    %877 = vmatprep.subr.bf16.mxu0 %v267
    %878 = vmatpush1.bf16.msra.mxu0 %v266
    %879 = vmatprep.subr.bf16.mxu0 %v269
    %880 = vmatpush1.bf16.msra.mxu0 %v268
    %881 = vmatprep.subr.bf16.mxu0 %v271
    %882 = vmatpush1.bf16.msra.mxu0 %v270
    %883 = vmatprep.subr.bf16.mxu0 %v273
    %884 = vmatpush1.bf16.msra.mxu0 %v272
    %885 = vmatprep.subr.bf16.mxu0 %v275
    %886 = vmatpush1.bf16.msra.mxu0 %v274
    %887 = vmatprep.subr.bf16.mxu0 0
    %888 = vmatpush1.bf16.msra.mxu0 0
    %889 = vmatprep.subr.bf16.mxu0 0
    %890 = vmatpush1.bf16.msra.mxu0 0
    %891 = vmatprep.subr.bf16.mxu0 0
    %892 = vmatpush1.bf16.msra.mxu0 0
    %893 = vmatprep.subr.bf16.mxu0 0
    %894 = vmatpush1.bf16.msra.mxu0 0
    %895 = vmatprep.subr.bf16.mxu0 0
    %896 = vmatpush1.bf16.msra.mxu0 0
    %897 = vmatprep.subr.bf16.mxu0 0
    %898 = vmatpush1.bf16.msra.mxu0 0
    %899 = vmatprep.subr.bf16.mxu0 0
    %900 = vmatpush1.bf16.msra.mxu0 0
    %901 = vmatprep.subr.bf16.mxu0 0
    %902 = vmatpush1.bf16.msra.mxu0 0
    %903 = vmatprep.mubr.bf16.mxu0 0
    %904 = vmatmul.mubr.bf16.gmra.mrb[0].mxu0 %v870
    %v905 = vpop.f32.mrb[0].mxu0
    %v906 = vadd.f32 0.0, %v905
    %v907 = vpop.f32.mrb[0].mxu0
    %v908 = vadd.f32 0.0, %v907
    %v909 = vpop.f32.mrb[0].mxu0
    %v910 = vpop.f32.mrb[0].mxu0
    %911 = vdwg.mxu0
    %v912 = vpack.c.bf16 %v866, %v866
    %913 = vmatprep.subr.bf16.mxu0 %v452
    %914 = vmatpush1.bf16.msra.mxu0 %v451
    %915 = vmatprep.subr.bf16.mxu0 %v454
    %916 = vmatpush1.bf16.msra.mxu0 %v453
    %917 = vmatprep.subr.bf16.mxu0 %v456
    %918 = vmatpush1.bf16.msra.mxu0 %v455
    %919 = vmatprep.subr.bf16.mxu0 %v458
    %920 = vmatpush1.bf16.msra.mxu0 %v457
    %921 = vmatprep.subr.bf16.mxu0 %v460
    %922 = vmatpush1.bf16.msra.mxu0 %v459
    %923 = vmatprep.subr.bf16.mxu0 %v462
    %924 = vmatpush1.bf16.msra.mxu0 %v461
    %925 = vmatprep.subr.bf16.mxu0 %v464
    %926 = vmatpush1.bf16.msra.mxu0 %v463
    %927 = vmatprep.subr.bf16.mxu0 %v466
    %928 = vmatpush1.bf16.msra.mxu0 %v465
    %929 = vmatprep.subr.bf16.mxu0 0
    %930 = vmatpush1.bf16.msra.mxu0 0
    %931 = vmatprep.subr.bf16.mxu0 0
    %932 = vmatpush1.bf16.msra.mxu0 0
    %933 = vmatprep.subr.bf16.mxu0 0
    %934 = vmatpush1.bf16.msra.mxu0 0
    %935 = vmatprep.subr.bf16.mxu0 0
    %936 = vmatpush1.bf16.msra.mxu0 0
    %937 = vmatprep.subr.bf16.mxu0 0
    %938 = vmatpush1.bf16.msra.mxu0 0
    %939 = vmatprep.subr.bf16.mxu0 0
    %940 = vmatpush1.bf16.msra.mxu0 0
    %941 = vmatprep.subr.bf16.mxu0 0
    %942 = vmatpush1.bf16.msra.mxu0 0
    %943 = vmatprep.subr.bf16.mxu0 0
    %944 = vmatpush1.bf16.msra.mxu0 0
    %945 = vmatprep.mubr.bf16.mxu0 0
    %946 = vmatmul.mubr.bf16.gmra.mrb[0].mxu0 %v912
    %v947 = vpop.f32.mrb[0].mxu0
    %v948 = vadd.f32 0.0, %v947
    %v949 = vpop.f32.mrb[0].mxu0
    %v950 = vadd.f32 0.0, %v949
    %v951 = vpop.f32.mrb[0].mxu0
    %v952 = vpop.f32.mrb[0].mxu0
    %953 = vdwg.mxu0
    %v954 = vpack.c.bf16 %v869, %v869
    %955 = vmatprep.subr.bf16.mxu0 0
    %956 = vmatpush1.bf16.msra.mxu0 %v671
    %957 = vmatprep.subr.bf16.mxu0 0
    %958 = vmatpush1.bf16.msra.mxu0 %v672
    %959 = vmatprep.subr.bf16.mxu0 0
    %960 = vmatpush1.bf16.msra.mxu0 %v673
    %961 = vmatprep.subr.bf16.mxu0 0
    %962 = vmatpush1.bf16.msra.mxu0 %v674
    %963 = vmatprep.subr.bf16.mxu0 0
    %964 = vmatpush1.bf16.msra.mxu0 %v675
    %965 = vmatprep.subr.bf16.mxu0 0
    %966 = vmatpush1.bf16.msra.mxu0 %v676
    %967 = vmatprep.subr.bf16.mxu0 0
    %968 = vmatpush1.bf16.msra.mxu0 %v677
    %969 = vmatprep.subr.bf16.mxu0 0
    %970 = vmatpush1.bf16.msra.mxu0 %v678
    %971 = vmatprep.subr.bf16.mxu0 0
    %972 = vmatpush1.bf16.msra.mxu0 0
    %973 = vmatprep.subr.bf16.mxu0 0
    %974 = vmatpush1.bf16.msra.mxu0 0
    %975 = vmatprep.subr.bf16.mxu0 0
    %976 = vmatpush1.bf16.msra.mxu0 0
    %977 = vmatprep.subr.bf16.mxu0 0
    %978 = vmatpush1.bf16.msra.mxu0 0
    %979 = vmatprep.subr.bf16.mxu0 0
    %980 = vmatpush1.bf16.msra.mxu0 0
    %981 = vmatprep.subr.bf16.mxu0 0
    %982 = vmatpush1.bf16.msra.mxu0 0
    %983 = vmatprep.subr.bf16.mxu0 0
    %984 = vmatpush1.bf16.msra.mxu0 0
    %985 = vmatprep.subr.bf16.mxu0 0
    %986 = vmatpush1.bf16.msra.mxu0 0
    %987 = vmatprep.mubr.bf16.mxu0 0
    %988 = vmatmul.mubr.bf16.gmra.mrb[0].mxu0 %v954
    %v989 = vpop.f32.mrb[0].mxu0
    %v990 = vadd.f32 0.0, %v989
    %v991 = vpop.f32.mrb[0].mxu0
    %v992 = vpop.f32.mrb[0].mxu0
    %v993 = vpop.f32.mrb[0].mxu0
    %994 = vdwg.mxu0
    %v995 = vld [vmem:[#allocation2 + $0x28] sm:$0xff]
    %v996 = vadd.f32 %v995, %v906
    %v997 = vtanh.pop %v996
    %v998 = vadd.f32 %v340, %v908
    %v999 = vadd.f32 %v998, %v948
    %v1000 = vtanh.pop %v999
    %v1001 = vadd.f32 %v534, %v950
    %v1002 = vadd.f32 %v1001, %v990
    %v1003 = vtanh.pop %v1002
    %v1004 = vpack.c.bf16 %v997, %v997
    %1005 = vmatprep.subr.bf16.mxu0 %v261
    %1006 = vmatpush1.bf16.msra.mxu0 %v260
    %1007 = vmatprep.subr.bf16.mxu0 %v263
    %1008 = vmatpush1.bf16.msra.mxu0 %v262
    %1009 = vmatprep.subr.bf16.mxu0 %v265
    %1010 = vmatpush1.bf16.msra.mxu0 %v264
    %1011 = vmatprep.subr.bf16.mxu0 %v267
    %1012 = vmatpush1.bf16.msra.mxu0 %v266
    %1013 = vmatprep.subr.bf16.mxu0 %v269
    %1014 = vmatpush1.bf16.msra.mxu0 %v268
    %1015 = vmatprep.subr.bf16.mxu0 %v271
    %1016 = vmatpush1.bf16.msra.mxu0 %v270
    %1017 = vmatprep.subr.bf16.mxu0 %v273
    %1018 = vmatpush1.bf16.msra.mxu0 %v272
    %1019 = vmatprep.subr.bf16.mxu0 %v275
    %1020 = vmatpush1.bf16.msra.mxu0 %v274
    %1021 = vmatprep.subr.bf16.mxu0 0
    %1022 = vmatpush1.bf16.msra.mxu0 0
    %1023 = vmatprep.subr.bf16.mxu0 0
    %1024 = vmatpush1.bf16.msra.mxu0 0
    %1025 = vmatprep.subr.bf16.mxu0 0
    %1026 = vmatpush1.bf16.msra.mxu0 0
    %1027 = vmatprep.subr.bf16.mxu0 0
    %1028 = vmatpush1.bf16.msra.mxu0 0
    %1029 = vmatprep.subr.bf16.mxu0 0
    %1030 = vmatpush1.bf16.msra.mxu0 0
    %1031 = vmatprep.subr.bf16.mxu0 0
    %1032 = vmatpush1.bf16.msra.mxu0 0
    %1033 = vmatprep.subr.bf16.mxu0 0
    %1034 = vmatpush1.bf16.msra.mxu0 0
    %1035 = vmatprep.subr.bf16.mxu0 0
    %1036 = vmatpush1.bf16.msra.mxu0 0
    %1037 = vmatprep.mubr.bf16.mxu0 0
    %1038 = vmatmul.mubr.bf16.gmra.mrb[0].mxu0 %v1004
    %v1039 = vpop.f32.mrb[0].mxu0
    %v1040 = vadd.f32 0.0, %v1039
    %v1041 = vpop.f32.mrb[0].mxu0
    %v1042 = vadd.f32 0.0, %v1041
    %v1043 = vpop.f32.mrb[0].mxu0
    %v1044 = vpop.f32.mrb[0].mxu0
    %1045 = vdwg.mxu0
    %v1046 = vpack.c.bf16 %v1000, %v1000
    %1047 = vmatprep.subr.bf16.mxu0 %v452
    %1048 = vmatpush1.bf16.msra.mxu0 %v451
    %1049 = vmatprep.subr.bf16.mxu0 %v454
    %1050 = vmatpush1.bf16.msra.mxu0 %v453
    %1051 = vmatprep.subr.bf16.mxu0 %v456
    %1052 = vmatpush1.bf16.msra.mxu0 %v455
    %1053 = vmatprep.subr.bf16.mxu0 %v458
    %1054 = vmatpush1.bf16.msra.mxu0 %v457
    %1055 = vmatprep.subr.bf16.mxu0 %v460
    %1056 = vmatpush1.bf16.msra.mxu0 %v459
    %1057 = vmatprep.subr.bf16.mxu0 %v462
    %1058 = vmatpush1.bf16.msra.mxu0 %v461
    %1059 = vmatprep.subr.bf16.mxu0 %v464
    %1060 = vmatpush1.bf16.msra.mxu0 %v463
    %1061 = vmatprep.subr.bf16.mxu0 %v466
    %1062 = vmatpush1.bf16.msra.mxu0 %v465
    %1063 = vmatprep.subr.bf16.mxu0 0
    %1064 = vmatpush1.bf16.msra.mxu0 0
    %1065 = vmatprep.subr.bf16.mxu0 0
    %1066 = vmatpush1.bf16.msra.mxu0 0
    %1067 = vmatprep.subr.bf16.mxu0 0
    %1068 = vmatpush1.bf16.msra.mxu0 0
    %1069 = vmatprep.subr.bf16.mxu0 0
    %1070 = vmatpush1.bf16.msra.mxu0 0
    %1071 = vmatprep.subr.bf16.mxu0 0
    %1072 = vmatpush1.bf16.msra.mxu0 0
    %1073 = vmatprep.subr.bf16.mxu0 0
    %1074 = vmatpush1.bf16.msra.mxu0 0
    %1075 = vmatprep.subr.bf16.mxu0 0
    %1076 = vmatpush1.bf16.msra.mxu0 0
    %1077 = vmatprep.subr.bf16.mxu0 0
    %1078 = vmatpush1.bf16.msra.mxu0 0
    %1079 = vmatprep.mubr.bf16.mxu0 0
    %1080 = vmatmul.mubr.bf16.gmra.mrb[0].mxu0 %v1046
    %v1081 = vpop.f32.mrb[0].mxu0
    %v1082 = vadd.f32 0.0, %v1081
    %v1083 = vpop.f32.mrb[0].mxu0
    %v1084 = vadd.f32 0.0, %v1083
    %v1085 = vpop.f32.mrb[0].mxu0
    %v1086 = vpop.f32.mrb[0].mxu0
    %1087 = vdwg.mxu0
    %v1088 = vpack.c.bf16 %v1003, %v1003
    %1089 = vmatprep.subr.bf16.mxu0 0
    %1090 = vmatpush1.bf16.msra.mxu0 %v671
    %1091 = vmatprep.subr.bf16.mxu0 0
    %1092 = vmatpush1.bf16.msra.mxu0 %v672
    %1093 = vmatprep.subr.bf16.mxu0 0
    %1094 = vmatpush1.bf16.msra.mxu0 %v673
    %1095 = vmatprep.subr.bf16.mxu0 0
    %1096 = vmatpush1.bf16.msra.mxu0 %v674
    %1097 = vmatprep.subr.bf16.mxu0 0
    %1098 = vmatpush1.bf16.msra.mxu0 %v675
    %1099 = vmatprep.subr.bf16.mxu0 0
    %1100 = vmatpush1.bf16.msra.mxu0 %v676
    %1101 = vmatprep.subr.bf16.mxu0 0
    %1102 = vmatpush1.bf16.msra.mxu0 %v677
    %1103 = vmatprep.subr.bf16.mxu0 0
    %1104 = vmatpush1.bf16.msra.mxu0 %v678
    %1105 = vmatprep.subr.bf16.mxu0 0
    %1106 = vmatpush1.bf16.msra.mxu0 0
    %1107 = vmatprep.subr.bf16.mxu0 0
    %1108 = vmatpush1.bf16.msra.mxu0 0
    %1109 = vmatprep.subr.bf16.mxu0 0
    %1110 = vmatpush1.bf16.msra.mxu0 0
    %1111 = vmatprep.subr.bf16.mxu0 0
    %1112 = vmatpush1.bf16.msra.mxu0 0
    %1113 = vmatprep.subr.bf16.mxu0 0
    %1114 = vmatpush1.bf16.msra.mxu0 0
    %1115 = vmatprep.subr.bf16.mxu0 0
    %1116 = vmatpush1.bf16.msra.mxu0 0
    %1117 = vmatprep.subr.bf16.mxu0 0
    %1118 = vmatpush1.bf16.msra.mxu0 0
    %1119 = vmatprep.subr.bf16.mxu0 0
    %1120 = vmatpush1.bf16.msra.mxu0 0
    %1121 = vmatprep.mubr.bf16.mxu0 0
    %1122 = vmatmul.mubr.bf16.gmra.mrb[0].mxu0 %v1088
    %v1123 = vpop.f32.mrb[0].mxu0
    %v1124 = vadd.f32 0.0, %v1123
    %v1125 = vpop.f32.mrb[0].mxu0
    %v1126 = vpop.f32.mrb[0].mxu0
    %v1127 = vpop.f32.mrb[0].mxu0
    %1128 = vdwg.mxu0
    %v1129 = vld [vmem:[#allocation2 + $0x30] sm:$0xff]
    %v1130 = vadd.f32 %v1129, %v1040
    %v1131 = vtanh.pop %v1130
    %v1132 = vadd.f32 %v340, %v1042
    %v1133 = vadd.f32 %v1132, %v1082
    %v1134 = vtanh.pop %v1133
    %v1135 = vadd.f32 %v534, %v1084
    %v1136 = vadd.f32 %v1135, %v1124
    %v1137 = vtanh.pop %v1136
    %v1138 = vpack.c.bf16 %v1131, %v1131
    %1139 = vmatprep.subr.bf16.mxu0 %v261
    %1140 = vmatpush1.bf16.msra.mxu0 %v260
    %1141 = vmatprep.subr.bf16.mxu0 %v263
    %1142 = vmatpush1.bf16.msra.mxu0 %v262
    %1143 = vmatprep.subr.bf16.mxu0 %v265
    %1144 = vmatpush1.bf16.msra.mxu0 %v264
    %1145 = vmatprep.subr.bf16.mxu0 %v267
    %1146 = vmatpush1.bf16.msra.mxu0 %v266
    %1147 = vmatprep.subr.bf16.mxu0 %v269
    %1148 = vmatpush1.bf16.msra.mxu0 %v268
    %1149 = vmatprep.subr.bf16.mxu0 %v271
    %1150 = vmatpush1.bf16.msra.mxu0 %v270
    %1151 = vmatprep.subr.bf16.mxu0 %v273
    %1152 = vmatpush1.bf16.msra.mxu0 %v272
    %1153 = vmatprep.subr.bf16.mxu0 %v275
    %1154 = vmatpush1.bf16.msra.mxu0 %v274
    %1155 = vmatprep.subr.bf16.mxu0 0
    %1156 = vmatpush1.bf16.msra.mxu0 0
    %1157 = vmatprep.subr.bf16.mxu0 0
    %1158 = vmatpush1.bf16.msra.mxu0 0
    %1159 = vmatprep.subr.bf16.mxu0 0
    %1160 = vmatpush1.bf16.msra.mxu0 0
    %1161 = vmatprep.subr.bf16.mxu0 0
    %1162 = vmatpush1.bf16.msra.mxu0 0
    %1163 = vmatprep.subr.bf16.mxu0 0
    %1164 = vmatpush1.bf16.msra.mxu0 0
    %1165 = vmatprep.subr.bf16.mxu0 0
    %1166 = vmatpush1.bf16.msra.mxu0 0
    %1167 = vmatprep.subr.bf16.mxu0 0
    %1168 = vmatpush1.bf16.msra.mxu0 0
    %1169 = vmatprep.subr.bf16.mxu0 0
    %1170 = vmatpush1.bf16.msra.mxu0 0
    %1171 = vmatprep.mubr.bf16.mxu0 0
    %1172 = vmatmul.mubr.bf16.gmra.mrb[0].mxu0 %v1138
    %v1173 = vpop.f32.mrb[0].mxu0
    %v1174 = vadd.f32 0.0, %v1173
    %v1175 = vpop.f32.mrb[0].mxu0
    %v1176 = vadd.f32 0.0, %v1175
    %v1177 = vpop.f32.mrb[0].mxu0
    %v1178 = vpop.f32.mrb[0].mxu0
    %1179 = vdwg.mxu0
    %v1180 = vpack.c.bf16 %v1134, %v1134
    %1181 = vmatprep.subr.bf16.mxu0 %v452
    %1182 = vmatpush1.bf16.msra.mxu0 %v451
    %1183 = vmatprep.subr.bf16.mxu0 %v454
    %1184 = vmatpush1.bf16.msra.mxu0 %v453
    %1185 = vmatprep.subr.bf16.mxu0 %v456
    %1186 = vmatpush1.bf16.msra.mxu0 %v455
    %1187 = vmatprep.subr.bf16.mxu0 %v458
    %1188 = vmatpush1.bf16.msra.mxu0 %v457
    %1189 = vmatprep.subr.bf16.mxu0 %v460
    %1190 = vmatpush1.bf16.msra.mxu0 %v459
    %1191 = vmatprep.subr.bf16.mxu0 %v462
    %1192 = vmatpush1.bf16.msra.mxu0 %v461
    %1193 = vmatprep.subr.bf16.mxu0 %v464
    %1194 = vmatpush1.bf16.msra.mxu0 %v463
    %1195 = vmatprep.subr.bf16.mxu0 %v466
    %1196 = vmatpush1.bf16.msra.mxu0 %v465
    %1197 = vmatprep.subr.bf16.mxu0 0
    %1198 = vmatpush1.bf16.msra.mxu0 0
    %1199 = vmatprep.subr.bf16.mxu0 0
    %1200 = vmatpush1.bf16.msra.mxu0 0
    %1201 = vmatprep.subr.bf16.mxu0 0
    %1202 = vmatpush1.bf16.msra.mxu0 0
    %1203 = vmatprep.subr.bf16.mxu0 0
    %1204 = vmatpush1.bf16.msra.mxu0 0
    %1205 = vmatprep.subr.bf16.mxu0 0
    %1206 = vmatpush1.bf16.msra.mxu0 0
    %1207 = vmatprep.subr.bf16.mxu0 0
    %1208 = vmatpush1.bf16.msra.mxu0 0
    %1209 = vmatprep.subr.bf16.mxu0 0
    %1210 = vmatpush1.bf16.msra.mxu0 0
    %1211 = vmatprep.subr.bf16.mxu0 0
    %1212 = vmatpush1.bf16.msra.mxu0 0
    %1213 = vmatprep.mubr.bf16.mxu0 0
    %1214 = vmatmul.mubr.bf16.gmra.mrb[0].mxu0 %v1180
    %v1215 = vpop.f32.mrb[0].mxu0
    %v1216 = vadd.f32 0.0, %v1215
    %v1217 = vpop.f32.mrb[0].mxu0
    %v1218 = vadd.f32 0.0, %v1217
    %v1219 = vpop.f32.mrb[0].mxu0
    %v1220 = vpop.f32.mrb[0].mxu0
    %1221 = vdwg.mxu0
    %v1222 = vpack.c.bf16 %v1137, %v1137
    %1223 = vmatprep.subr.bf16.mxu0 0
    %1224 = vmatpush1.bf16.msra.mxu0 %v671
    %1225 = vmatprep.subr.bf16.mxu0 0
    %1226 = vmatpush1.bf16.msra.mxu0 %v672
    %1227 = vmatprep.subr.bf16.mxu0 0
    %1228 = vmatpush1.bf16.msra.mxu0 %v673
    %1229 = vmatprep.subr.bf16.mxu0 0
    %1230 = vmatpush1.bf16.msra.mxu0 %v674
    %1231 = vmatprep.subr.bf16.mxu0 0
    %1232 = vmatpush1.bf16.msra.mxu0 %v675
    %1233 = vmatprep.subr.bf16.mxu0 0
    %1234 = vmatpush1.bf16.msra.mxu0 %v676
    %1235 = vmatprep.subr.bf16.mxu0 0
    %1236 = vmatpush1.bf16.msra.mxu0 %v677
    %1237 = vmatprep.subr.bf16.mxu0 0
    %1238 = vmatpush1.bf16.msra.mxu0 %v678
    %1239 = vmatprep.subr.bf16.mxu0 0
    %1240 = vmatpush1.bf16.msra.mxu0 0
    %1241 = vmatprep.subr.bf16.mxu0 0
    %1242 = vmatpush1.bf16.msra.mxu0 0
    %1243 = vmatprep.subr.bf16.mxu0 0
    %1244 = vmatpush1.bf16.msra.mxu0 0
    %1245 = vmatprep.subr.bf16.mxu0 0
    %1246 = vmatpush1.bf16.msra.mxu0 0
    %1247 = vmatprep.subr.bf16.mxu0 0
    %1248 = vmatpush1.bf16.msra.mxu0 0
    %1249 = vmatprep.subr.bf16.mxu0 0
    %1250 = vmatpush1.bf16.msra.mxu0 0
    %1251 = vmatprep.subr.bf16.mxu0 0
    %1252 = vmatpush1.bf16.msra.mxu0 0
    %1253 = vmatprep.subr.bf16.mxu0 0
    %1254 = vmatpush1.bf16.msra.mxu0 0
    %1255 = vmatprep.mubr.bf16.mxu0 0
    %1256 = vmatmul.mubr.bf16.gmra.mrb[0].mxu0 %v1222
    %v1257 = vpop.f32.mrb[0].mxu0
    %v1258 = vadd.f32 0.0, %v1257
    %v1259 = vpop.f32.mrb[0].mxu0
    %v1260 = vpop.f32.mrb[0].mxu0
    %v1261 = vpop.f32.mrb[0].mxu0
    %1262 = vdwg.mxu0
    %v1263 = vld [vmem:[#allocation2 + $0x38] sm:$0xff]
    %v1264 = vadd.f32 %v1263, %v1174
    %v1265 = vtanh.pop %v1264
    %v1266 = vadd.f32 %v340, %v1176
    %v1267 = vadd.f32 %v1266, %v1216
    %v1268 = vtanh.pop %v1267
    %v1269 = vadd.f32 %v534, %v1218
    %v1270 = vadd.f32 %v1269, %v1258
    %v1271 = vtanh.pop %v1270
    %v1272 = vpack.c.bf16 %v1265, %v1265
    %1273 = vmatprep.subr.bf16.mxu0 %v261
    %1274 = vmatpush1.bf16.msra.mxu0 %v260
    %1275 = vmatprep.subr.bf16.mxu0 %v263
    %1276 = vmatpush1.bf16.msra.mxu0 %v262
    %1277 = vmatprep.subr.bf16.mxu0 %v265
    %1278 = vmatpush1.bf16.msra.mxu0 %v264
    %1279 = vmatprep.subr.bf16.mxu0 %v267
    %1280 = vmatpush1.bf16.msra.mxu0 %v266
    %1281 = vmatprep.subr.bf16.mxu0 %v269
    %1282 = vmatpush1.bf16.msra.mxu0 %v268
    %1283 = vmatprep.subr.bf16.mxu0 %v271
    %1284 = vmatpush1.bf16.msra.mxu0 %v270
    %1285 = vmatprep.subr.bf16.mxu0 %v273
    %1286 = vmatpush1.bf16.msra.mxu0 %v272
    %1287 = vmatprep.subr.bf16.mxu0 %v275
    %1288 = vmatpush1.bf16.msra.mxu0 %v274
    %1289 = vmatprep.subr.bf16.mxu0 0
    %1290 = vmatpush1.bf16.msra.mxu0 0
    %1291 = vmatprep.subr.bf16.mxu0 0
    %1292 = vmatpush1.bf16.msra.mxu0 0
    %1293 = vmatprep.subr.bf16.mxu0 0
    %1294 = vmatpush1.bf16.msra.mxu0 0
    %1295 = vmatprep.subr.bf16.mxu0 0
    %1296 = vmatpush1.bf16.msra.mxu0 0
    %1297 = vmatprep.subr.bf16.mxu0 0
    %1298 = vmatpush1.bf16.msra.mxu0 0
    %1299 = vmatprep.subr.bf16.mxu0 0
    %1300 = vmatpush1.bf16.msra.mxu0 0
    %1301 = vmatprep.subr.bf16.mxu0 0
    %1302 = vmatpush1.bf16.msra.mxu0 0
    %1303 = vmatprep.subr.bf16.mxu0 0
    %1304 = vmatpush1.bf16.msra.mxu0 0
    %1305 = vmatprep.mubr.bf16.mxu0 0
    %1306 = vmatmul.mubr.bf16.gmra.mrb[0].mxu0 %v1272
    %v1307 = vpop.f32.mrb[0].mxu0
    %v1308 = vpop.f32.mrb[0].mxu0
    %v1309 = vadd.f32 0.0, %v1308
    %v1310 = vpop.f32.mrb[0].mxu0
    %v1311 = vpop.f32.mrb[0].mxu0
    %1312 = vdwg.mxu0
    %v1313 = vpack.c.bf16 %v1268, %v1268
    %1314 = vmatprep.subr.bf16.mxu0 %v452
    %1315 = vmatpush1.bf16.msra.mxu0 %v451
    %1316 = vmatprep.subr.bf16.mxu0 %v454
    %1317 = vmatpush1.bf16.msra.mxu0 %v453
    %1318 = vmatprep.subr.bf16.mxu0 %v456
    %1319 = vmatpush1.bf16.msra.mxu0 %v455
    %1320 = vmatprep.subr.bf16.mxu0 %v458
    %1321 = vmatpush1.bf16.msra.mxu0 %v457
    %1322 = vmatprep.subr.bf16.mxu0 %v460
    %1323 = vmatpush1.bf16.msra.mxu0 %v459
    %1324 = vmatprep.subr.bf16.mxu0 %v462
    %1325 = vmatpush1.bf16.msra.mxu0 %v461
    %1326 = vmatprep.subr.bf16.mxu0 %v464
    %1327 = vmatpush1.bf16.msra.mxu0 %v463
    %1328 = vmatprep.subr.bf16.mxu0 %v466
    %1329 = vmatpush1.bf16.msra.mxu0 %v465
    %1330 = vmatprep.subr.bf16.mxu0 0
    %1331 = vmatpush1.bf16.msra.mxu0 0
    %1332 = vmatprep.subr.bf16.mxu0 0
    %1333 = vmatpush1.bf16.msra.mxu0 0
    %1334 = vmatprep.subr.bf16.mxu0 0
    %1335 = vmatpush1.bf16.msra.mxu0 0
    %1336 = vmatprep.subr.bf16.mxu0 0
    %1337 = vmatpush1.bf16.msra.mxu0 0
    %1338 = vmatprep.subr.bf16.mxu0 0
    %1339 = vmatpush1.bf16.msra.mxu0 0
    %1340 = vmatprep.subr.bf16.mxu0 0
    %1341 = vmatpush1.bf16.msra.mxu0 0
    %1342 = vmatprep.subr.bf16.mxu0 0
    %1343 = vmatpush1.bf16.msra.mxu0 0
    %1344 = vmatprep.subr.bf16.mxu0 0
    %1345 = vmatpush1.bf16.msra.mxu0 0
    %1346 = vmatprep.mubr.bf16.mxu0 0
    %1347 = vmatmul.mubr.bf16.gmra.mrb[0].mxu0 %v1313
    %v1348 = vpop.f32.mrb[0].mxu0
    %v1349 = vadd.f32 0.0, %v1348
    %v1350 = vpop.f32.mrb[0].mxu0
    %v1351 = vadd.f32 0.0, %v1350
    %v1352 = vpop.f32.mrb[0].mxu0
    %v1353 = vpop.f32.mrb[0].mxu0
    %1354 = vdwg.mxu0
    %v1355 = vpack.c.bf16 %v1271, %v1271
    %1356 = vmatprep.subr.bf16.mxu0 0
    %1357 = vmatpush1.bf16.msra.mxu0 %v671
    %1358 = vmatprep.subr.bf16.mxu0 0
    %1359 = vmatpush1.bf16.msra.mxu0 %v672
    %1360 = vmatprep.subr.bf16.mxu0 0
    %1361 = vmatpush1.bf16.msra.mxu0 %v673
    %1362 = vmatprep.subr.bf16.mxu0 0
    %1363 = vmatpush1.bf16.msra.mxu0 %v674
    %1364 = vmatprep.subr.bf16.mxu0 0
    %1365 = vmatpush1.bf16.msra.mxu0 %v675
    %1366 = vmatprep.subr.bf16.mxu0 0
    %1367 = vmatpush1.bf16.msra.mxu0 %v676
    %1368 = vmatprep.subr.bf16.mxu0 0
    %1369 = vmatpush1.bf16.msra.mxu0 %v677
    %1370 = vmatprep.subr.bf16.mxu0 0
    %1371 = vmatpush1.bf16.msra.mxu0 %v678
    %1372 = vmatprep.subr.bf16.mxu0 0
    %1373 = vmatpush1.bf16.msra.mxu0 0
    %1374 = vmatprep.subr.bf16.mxu0 0
    %1375 = vmatpush1.bf16.msra.mxu0 0
    %1376 = vmatprep.subr.bf16.mxu0 0
    %1377 = vmatpush1.bf16.msra.mxu0 0
    %1378 = vmatprep.subr.bf16.mxu0 0
    %1379 = vmatpush1.bf16.msra.mxu0 0
    %1380 = vmatprep.subr.bf16.mxu0 0
    %1381 = vmatpush1.bf16.msra.mxu0 0
    %1382 = vmatprep.subr.bf16.mxu0 0
    %1383 = vmatpush1.bf16.msra.mxu0 0
    %1384 = vmatprep.subr.bf16.mxu0 0
    %1385 = vmatpush1.bf16.msra.mxu0 0
    %1386 = vmatprep.subr.bf16.mxu0 0
    %1387 = vmatpush1.bf16.msra.mxu0 0
    %1388 = vmatprep.mubr.bf16.mxu0 0
    %1389 = vmatmul.mubr.bf16.gmra.mrb[0].mxu0 %v1355
    %v1390 = vpop.f32.mrb[0].mxu0
    %v1391 = vadd.f32 0.0, %v1390
    %v1392 = vpop.f32.mrb[0].mxu0
    %v1393 = vpop.f32.mrb[0].mxu0
    %v1394 = vpop.f32.mrb[0].mxu0
    %1395 = vdwg.mxu0
    %v1396 = vadd.f32 %v340, %v1309
    %v1397 = vadd.f32 %v1396, %v1349
    %v1398 = vtanh.pop %v1397
    %v1399 = vadd.f32 %v534, %v1351
    %v1400 = vadd.f32 %v1399, %v1391
    %v1401 = vtanh.pop %v1400
    %v1402 = vpack.c.bf16 %v1398, %v1398
    %1403 = vmatprep.subr.bf16.mxu0 %v452
    %1404 = vmatpush1.bf16.msra.mxu0 %v451
    %1405 = vmatprep.subr.bf16.mxu0 %v454
    %1406 = vmatpush1.bf16.msra.mxu0 %v453
    %1407 = vmatprep.subr.bf16.mxu0 %v456
    %1408 = vmatpush1.bf16.msra.mxu0 %v455
    %1409 = vmatprep.subr.bf16.mxu0 %v458
    %1410 = vmatpush1.bf16.msra.mxu0 %v457
    %1411 = vmatprep.subr.bf16.mxu0 %v460
    %1412 = vmatpush1.bf16.msra.mxu0 %v459
    %1413 = vmatprep.subr.bf16.mxu0 %v462
    %1414 = vmatpush1.bf16.msra.mxu0 %v461
    %1415 = vmatprep.subr.bf16.mxu0 %v464
    %1416 = vmatpush1.bf16.msra.mxu0 %v463
    %1417 = vmatprep.subr.bf16.mxu0 %v466
    %1418 = vmatpush1.bf16.msra.mxu0 %v465
    %1419 = vmatprep.subr.bf16.mxu0 0
    %1420 = vmatpush1.bf16.msra.mxu0 0
    %1421 = vmatprep.subr.bf16.mxu0 0
    %1422 = vmatpush1.bf16.msra.mxu0 0
    %1423 = vmatprep.subr.bf16.mxu0 0
    %1424 = vmatpush1.bf16.msra.mxu0 0
    %1425 = vmatprep.subr.bf16.mxu0 0
    %1426 = vmatpush1.bf16.msra.mxu0 0
    %1427 = vmatprep.subr.bf16.mxu0 0
    %1428 = vmatpush1.bf16.msra.mxu0 0
    %1429 = vmatprep.subr.bf16.mxu0 0
    %1430 = vmatpush1.bf16.msra.mxu0 0
    %1431 = vmatprep.subr.bf16.mxu0 0
    %1432 = vmatpush1.bf16.msra.mxu0 0
    %1433 = vmatprep.subr.bf16.mxu0 0
    %1434 = vmatpush1.bf16.msra.mxu0 0
    %1435 = vmatprep.mubr.bf16.mxu0 0
    %1436 = vmatmul.mubr.bf16.gmra.mrb[0].mxu0 %v1402
    %v1437 = vpop.f32.mrb[0].mxu0
    %v1438 = vpop.f32.mrb[0].mxu0
    %v1439 = vadd.f32 0.0, %v1438
    %v1440 = vpop.f32.mrb[0].mxu0
    %v1441 = vpop.f32.mrb[0].mxu0
    %1442 = vdwg.mxu0
    %v1443 = vpack.c.bf16 %v1401, %v1401
    %1444 = vmatprep.subr.bf16.mxu0 0
    %1445 = vmatpush1.bf16.msra.mxu0 %v671
    %1446 = vmatprep.subr.bf16.mxu0 0
    %1447 = vmatpush1.bf16.msra.mxu0 %v672
    %1448 = vmatprep.subr.bf16.mxu0 0
    %1449 = vmatpush1.bf16.msra.mxu0 %v673
    %1450 = vmatprep.subr.bf16.mxu0 0
    %1451 = vmatpush1.bf16.msra.mxu0 %v674
    %1452 = vmatprep.subr.bf16.mxu0 0
    %1453 = vmatpush1.bf16.msra.mxu0 %v675
    %1454 = vmatprep.subr.bf16.mxu0 0
    %1455 = vmatpush1.bf16.msra.mxu0 %v676
    %1456 = vmatprep.subr.bf16.mxu0 0
    %1457 = vmatpush1.bf16.msra.mxu0 %v677
    %1458 = vmatprep.subr.bf16.mxu0 0
    %1459 = vmatpush1.bf16.msra.mxu0 %v678
    %1460 = vmatprep.subr.bf16.mxu0 0
    %1461 = vmatpush1.bf16.msra.mxu0 0
    %1462 = vmatprep.subr.bf16.mxu0 0
    %1463 = vmatpush1.bf16.msra.mxu0 0
    %1464 = vmatprep.subr.bf16.mxu0 0
    %1465 = vmatpush1.bf16.msra.mxu0 0
    %1466 = vmatprep.subr.bf16.mxu0 0
    %1467 = vmatpush1.bf16.msra.mxu0 0
    %1468 = vmatprep.subr.bf16.mxu0 0
    %1469 = vmatpush1.bf16.msra.mxu0 0
    %1470 = vmatprep.subr.bf16.mxu0 0
    %1471 = vmatpush1.bf16.msra.mxu0 0
    %1472 = vmatprep.subr.bf16.mxu0 0
    %1473 = vmatpush1.bf16.msra.mxu0 0
    %1474 = vmatprep.subr.bf16.mxu0 0
    %1475 = vmatpush1.bf16.msra.mxu0 0
    %1476 = vmatprep.mubr.bf16.mxu0 0
    %1477 = vmatmul.mubr.bf16.gmra.mrb[0].mxu0 %v1443
    %v1478 = vpop.f32.mrb[0].mxu0
    %v1479 = vadd.f32 0.0, %v1478
    %v1480 = vpop.f32.mrb[0].mxu0
    %v1481 = vpop.f32.mrb[0].mxu0
    %v1482 = vpop.f32.mrb[0].mxu0
    %1483 = vdwg.mxu0
    %v1484 = vadd.f32 %v534, %v1439
    %v1485 = vadd.f32 %v1484, %v1479
    %v1486 = vtanh.pop %v1485
    %v1487 = vld [vmem:[%s6] sm:$0x1]
    %v1489 = vlaneseq
    %v1490 = vshrl.u32 %v1489, 7
    %v1491 = vsub.s32 0, %v1490
    %v1492 = vrot.slane %v1487, %v1491
    %v1494 = vmul.f32 %v1486, %v1492
    %1495 = vadd.xlane.f32.xlu0 %v1494
    %v1496 = vpop.xlane.xlu0 %1495
    %v1497 = vld [vmem:[#allocation3] sm:$0x1]
    %v1499 = vlaneseq
    %v1500 = vshrl.u32 %v1499, 7
    %v1501 = vsub.s32 0, %v1500
    %v1502 = vrot.slane %v1497, %v1501
    %v1504 = vadd.f32 %v1496, %v1502
    %vm1505 = vcmask 7168
    %1506 = vst.msk [vmem:[%s8] sm:$0xff] %vm1505, %v1504
    // Predicated region
    $region42: #{rnn_model_forward.1} parent=1 // pred_check
      _
    $region43: #{rnn_model_forward.1} parent=1 // pred_check_branch
      %1508 = sbr.rel (0) target = $region45
    $region44: #{rnn_model_forward.1} parent=1 // pred_region
      _
    $region45: #{rnn_model_forward.1} parent=1 // pred_fallthru
      _
    // Predicated region
    $region46: #{rnn_model_forward.1} parent=1 // pred_check
      _
    $region47: #{rnn_model_forward.1} parent=1 // pred_check_branch
      %1510 = sbr.rel (0) target = $region49
    $region48: #{rnn_model_forward.1} parent=1 // pred_region
      _
    $region49: #{rnn_model_forward.1} parent=1 // pred_fallthru
      _
    %1511 = vsyncpa [#allocation5], 1
    %1512 = vsyncpa [#allocation7], 1

</llo_original>
